<compile_context>
chip_gen: v7x
topology: tpu7x:2x2x1
jax: 0.10.0
libtpu: 0.0.40
codegen_flags: <defaults>
</compile_context>

<pallas_src>
import functools

import jax
import jax.numpy as jnp
from jax.experimental import pallas as pl
from jax.experimental.pallas import tpu as pltpu

VMEM = pltpu.MemorySpace.VMEM
F32 = jnp.float32
BF16 = jnp.bfloat16


# ------------------------------------------------------------------ fused kernel
def _bn_elu(x, gamma, beta):
    # BatchNorm1d (training-style batch statistics, biased variance) + ELU(alpha=1)
    n = x.shape[0]
    inv_n = 1.0 / n
    mean = jnp.sum(x, axis=0, keepdims=True) * inv_n
    xc = x - mean
    var = jnp.sum(xc * xc, axis=0, keepdims=True) * inv_n
    y = xc * jax.lax.rsqrt(var + 1e-5) * gamma + beta
    return jnp.where(y > 0, y, jnp.exp(jnp.minimum(y, 0.0)) - 1.0)


def _gat_fused_kernel(h_ref, e_ref, src_oh_ref, dst_oh_ref, mask_ref,
                      wh_ref, we_ref, wproj_ref, small_ref,
                      h_out_ref, e_out_ref,
                      *, num_heads, out_dim, residual):
    H, D = num_heads, out_dim
    HD = H * D

    h_f32 = h_ref[...]                                  # [N, in_dim] f32
    e_f32 = e_ref[...]                                  # [E, in_dim] f32
    h_b = h_f32.astype(BF16)
    e_b = e_f32.astype(BF16)

    # Head-stacked node / edge projections (lane width = H*D).
    z_h = jnp.dot(h_b, wh_ref[...], preferred_element_type=F32)          # [N, HD]
    z_e = jnp.dot(e_b, we_ref[...], preferred_element_type=F32)          # [E, HD]

    # In-kernel gather of z_h rows for edge endpoints (one-hot matmul, MXU).
    z_h_b = z_h.astype(BF16)
    z_src = jnp.dot(src_oh_ref[...], z_h_b, preferred_element_type=F32)  # [E, HD]
    z_dst = jnp.dot(dst_oh_ref[...], z_h_b, preferred_element_type=F32)  # [E, HD]

    # Edge projection: cat([z_e, z_src, z_dst]) @ Wproj, with block-diagonal
    # (head-stacked) weights split into its three D-blocks (no [E,3HD] concat copy).
    wp = wproj_ref[...]                                                   # [3HD, HD] bf16
    e_proj = (jnp.dot(z_e.astype(BF16), wp[0:HD, :], preferred_element_type=F32)
              + jnp.dot(z_src.astype(BF16), wp[HD:2 * HD, :], preferred_element_type=F32)
              + jnp.dot(z_dst.astype(BF16), wp[2 * HD:3 * HD, :], preferred_element_type=F32)
              + small_ref[0:1, :])                                        # [E, HD] f32

    # Attention logits on the VPU: elementwise product with head-stacked attn
    # weight rows, then per-head block-sum via a tiny 0/1 matmul (no [D,1] MXU pass).
    prod = (z_e * small_ref[1:2, :]
            + z_src * small_ref[2:3, :]
            + z_dst * small_ref[3:4, :])                                  # [E, HD] f32

    r1 = jax.lax.broadcasted_iota(jnp.int32, (HD, H), 0)   # feature index j
    c1 = jax.lax.broadcasted_iota(jnp.int32, (HD, H), 1)   # head index h
    expand_t = ((r1 >= c1 * D) & (r1 < (c1 + 1) * D)).astype(F32)         # [HD, H]

    attn = jnp.dot(prod, expand_t, preferred_element_type=F32)            # [E, H]
    attn = jnp.where(attn > 0, attn, 0.01 * attn)                         # leaky_relu

    # Per-destination softmax aggregation.  A global shift keeps exp() stable
    # (softmax is shift-invariant per node); the 0/1 incidence mask both zeroes
    # non-incident edges and performs the segment sums as MXU matmuls.
    m_g = jnp.max(jnp.max(attn, axis=1, keepdims=True), axis=0, keepdims=True)
    p = jnp.exp(attn - m_g)                                               # [E, H]

    r2 = jax.lax.broadcasted_iota(jnp.int32, (H, HD), 0)    # head index h
    c2 = jax.lax.broadcasted_iota(jnp.int32, (H, HD), 1)    # feature index j
    expand = ((c2 >= r2 * D) & (c2 < (r2 + 1) * D)).astype(F32)           # [H, HD]
    p_exp = jnp.dot(p, expand, preferred_element_type=F32)                # [E, HD]

    mask = mask_ref[...]                                                  # [N, E] bf16 0/1
    num = jnp.dot(mask, (p_exp * z_src).astype(BF16),
                  preferred_element_type=F32)                             # [N, HD]
    if HD <= 128:
        # The MXU lane width is padded to 128 anyway, so summing the already
        # head-broadcast p_exp costs the same as the narrow [E,H] pass and
        # removes the extra [N,H]@[H,HD] broadcast matmul.
        denom_exp = jnp.dot(mask, p_exp.astype(BF16),
                            preferred_element_type=F32)                   # [N, HD]
    else:
        denom = jnp.dot(mask, p.astype(BF16), preferred_element_type=F32)  # [N, H]
        denom_exp = jnp.dot(denom, expand, preferred_element_type=F32)     # [N, HD]
    h_agg = num * pl.reciprocal(jnp.maximum(denom_exp, 1e-20), approx=True)

    # BatchNorm (per-feature over all rows, so it commutes with head concat) + ELU.
    h_act = _bn_elu(h_agg, small_ref[4:5, :], small_ref[5:6, :])
    e_act = _bn_elu(e_proj, small_ref[6:7, :], small_ref[7:8, :])

    if residual:                         # static python flag (in_dim == H*D)
        h_act = h_act + h_f32
        e_act = e_act + e_f32

    h_out_ref[...] = h_act
    e_out_ref[...] = e_act


# ---------------------------------------------------------------- parameters
def init_params(key, in_dim, out_dim, num_heads):
    heads = []
    for _ in range(num_heads):
        key, k0, k1, k2, k3, k4 = jax.random.split(key, 6)
        heads.append(dict(
            wh=0.1 * jax.random.normal(k0, (in_dim, out_dim), F32),
            we=0.1 * jax.random.normal(k1, (in_dim, out_dim), F32),
            wproj=0.1 * jax.random.normal(k2, (3 * out_dim, out_dim), F32),
            bproj=0.1 * jax.random.normal(k3, (1, out_dim), F32),
            wattn=0.1 * jax.random.normal(k4, (3 * out_dim, 1), F32),
            gamma_h=jnp.ones((1, out_dim), F32),
            beta_h=jnp.zeros((1, out_dim), F32),
            gamma_e=jnp.ones((1, out_dim), F32),
            beta_e=jnp.zeros((1, out_dim), F32),
        ))
    return heads


def _stack_head_params(params):
    """Stack per-head parameters into head-dense (lane-dense) tensors."""
    D = params[0]['wh'].shape[1]
    H = len(params)
    HD = H * D

    wh_all = jnp.concatenate([p['wh'] for p in params], axis=1)           # [in_dim, HD]
    we_all = jnp.concatenate([p['we'] for p in params], axis=1)

    def block_diag(blocks):
        out = jnp.zeros((HD, HD), F32)
        for i, b in enumerate(blocks):
            out = out.at[i * D:(i + 1) * D, i * D:(i + 1) * D].set(b)
        return out

    wpe = block_diag([p['wproj'][:D] for p in params])          # z_e   part
    wps = block_diag([p['wproj'][D:2 * D] for p in params])     # z_src part
    wpd = block_diag([p['wproj'][2 * D:] for p in params])      # z_dst part
    wproj_bd = jnp.concatenate([wpe, wps, wpd], axis=0)                   # [3HD, HD]

    def attn_row(sl):
        return jnp.concatenate([p['wattn'][sl].reshape(1, D) for p in params], axis=1)

    small = jnp.concatenate([
        jnp.concatenate([p['bproj'] for p in params], axis=1),    # 0: proj bias
        attn_row(slice(0, D)),                                    # 1: wa_e
        attn_row(slice(D, 2 * D)),                                # 2: wa_src
        attn_row(slice(2 * D, 3 * D)),                            # 3: wa_dst
        jnp.concatenate([p['gamma_h'] for p in params], axis=1),  # 4
        jnp.concatenate([p['beta_h'] for p in params], axis=1),   # 5
        jnp.concatenate([p['gamma_e'] for p in params], axis=1),  # 6
        jnp.concatenate([p['beta_e'] for p in params], axis=1),   # 7
    ], axis=0)                                                            # [8, HD] f32

    return wh_all.astype(BF16), we_all.astype(BF16), wproj_bd.astype(BF16), small


# ---------------------------------------------------------------- forward pass
def custom_gat_layer_edge_repr_feat(params, h, e, src, dst, residual=True):
    # TODO(synk): edge_lr=True branch (MEFG module) not implemented (default edge_lr=False).
    # TODO(synk): dropout is identity (p=0 / eval); BN running stats are not updated.
    N, in_dim = h.shape
    E = int(src.shape[0])
    H = len(params)
    D = params[0]['wh'].shape[1]
    HD = H * D
    residual = bool(residual) and (in_dim == HD)   # mirrors the PyTorch constructor check

    wh_all, we_all, wproj_bd, small = _stack_head_params(params)

    node_ids = jnp.arange(N, dtype=jnp.int32)
    src_oh = (node_ids[None, :] == src[:, None]).astype(BF16)   # [E, N] gather matrix
    dst_oh = (node_ids[None, :] == dst[:, None]).astype(BF16)   # [E, N] gather matrix
    mask = (node_ids[:, None] == dst[None, :]).astype(BF16)     # [N, E] incidence (= dst_oh^T)
    # TODO(synk): for large graphs replace the dense O(N*E) one-hot/incidence with a
    # CSR segment softmax (scalar-prefetched row offsets) and tile E/N with a grid;
    # BN would then need a two-pass / merged-moments scheme.

    kernel = functools.partial(_gat_fused_kernel,
                               num_heads=H, out_dim=D, residual=residual)
    h_out, e_out = pl.pallas_call(
        kernel,
        out_shape=(jax.ShapeDtypeStruct((N, HD), F32),
                   jax.ShapeDtypeStruct((E, HD), F32)),
        in_specs=[pl.BlockSpec(memory_space=VMEM)] * 9,
        out_specs=(pl.BlockSpec(memory_space=VMEM),
                   pl.BlockSpec(memory_space=VMEM)),
        compiler_params=pltpu.CompilerParams(vmem_limit_bytes=64 * 1024 * 1024),
    )(h, e, src_oh, dst_oh, mask, wh_all, we_all, wproj_bd, small)
    return h_out, e_out


if __name__ == "__main__":
    in_dim, out_dim, num_heads = 32, 8, 4
    N = 16
    key = jax.random.PRNGKey(0)
    k_h, k_e, k_p = jax.random.split(key, 3)

    # deterministic small graph: node i -> (i+1)%N and node i -> (i+3)%N
    src = jnp.concatenate([jnp.arange(N), jnp.arange(N)]).astype(jnp.int32)
    dst = jnp.concatenate([(jnp.arange(N) + 1) % N,
                           (jnp.arange(N) + 3) % N]).astype(jnp.int32)
    E = int(src.shape[0])

    h = jax.random.normal(k_h, (N, in_dim), F32)
    e = jax.random.normal(k_e, (E, in_dim), F32)
    params = init_params(k_p, in_dim, out_dim, num_heads)

    h_out, e_out = custom_gat_layer_edge_repr_feat(params, h, e, src, dst)
    jax.block_until_ready((h_out, e_out))
    assert h_out.shape == (N, out_dim * num_heads)
    assert e_out.shape == (E, out_dim * num_heads)
    assert bool(jnp.all(jnp.isfinite(h_out))) and bool(jnp.all(jnp.isfinite(e_out)))
    print("KERNEL_OK")
</pallas_src>

<mosaic_0001>
module attributes {stable_mosaic.version = 11 : i64} {
  func.func @_gat_fused_kernel(%arg0: memref<16x32xf32, #tpu.memory_space<vmem>>, %arg1: memref<32x32xf32, #tpu.memory_space<vmem>>, %arg2: memref<32x16xbf16, #tpu.memory_space<vmem>>, %arg3: memref<32x16xbf16, #tpu.memory_space<vmem>>, %arg4: memref<16x32xbf16, #tpu.memory_space<vmem>>, %arg5: memref<32x32xbf16, #tpu.memory_space<vmem>>, %arg6: memref<32x32xbf16, #tpu.memory_space<vmem>>, %arg7: memref<96x32xbf16, #tpu.memory_space<vmem>>, %arg8: memref<8x32xf32, #tpu.memory_space<vmem>>, %arg9: memref<16x32xf32, #tpu.memory_space<vmem>>, %arg10: memref<32x32xf32, #tpu.memory_space<vmem>>) attributes {dimension_semantics = [], scalar_prefetch = 0 : i64, scratch_operands = 0 : i64, tpu.core_type = #tpu.core_type<tc>} {
    %c0 = arith.constant 0 : index
    %c0_0 = arith.constant 0 : index
    %0 = vector.load %arg0[%c0, %c0_0] : memref<16x32xf32, #tpu.memory_space<vmem>>, vector<16x32xf32>
    %c0_1 = arith.constant 0 : index
    %c0_2 = arith.constant 0 : index
    %1 = vector.load %arg1[%c0_1, %c0_2] : memref<32x32xf32, #tpu.memory_space<vmem>>, vector<32x32xf32>
    %2 = arith.truncf %0 : vector<16x32xf32> to vector<16x32xbf16>
    %3 = arith.truncf %1 : vector<32x32xf32> to vector<32x32xbf16>
    %c0_3 = arith.constant 0 : index
    %c0_4 = arith.constant 0 : index
    %4 = vector.load %arg5[%c0_3, %c0_4] : memref<32x32xbf16, #tpu.memory_space<vmem>>, vector<32x32xbf16>
    %cst = arith.constant dense<0.000000e+00> : vector<16x32xf32>
    %5 = tpu.matmul %2, %4, %cst {dimension_numbers = #tpu.dot_dimension_numbers<[1], [0], [0], [1], [0, 0, 1, 1], [], []>} : vector<16x32xbf16>, vector<32x32xbf16>, vector<16x32xf32> -> vector<16x32xf32>
    %c0_5 = arith.constant 0 : index
    %c0_6 = arith.constant 0 : index
    %6 = vector.load %arg6[%c0_5, %c0_6] : memref<32x32xbf16, #tpu.memory_space<vmem>>, vector<32x32xbf16>
    %cst_7 = arith.constant dense<0.000000e+00> : vector<32x32xf32>
    %7 = tpu.matmul %3, %6, %cst_7 {dimension_numbers = #tpu.dot_dimension_numbers<[1], [0], [0], [1], [0, 0, 1, 1], [], []>} : vector<32x32xbf16>, vector<32x32xbf16>, vector<32x32xf32> -> vector<32x32xf32>
    %8 = arith.truncf %5 : vector<16x32xf32> to vector<16x32xbf16>
    %c0_8 = arith.constant 0 : index
    %c0_9 = arith.constant 0 : index
    %9 = vector.load %arg2[%c0_8, %c0_9] : memref<32x16xbf16, #tpu.memory_space<vmem>>, vector<32x16xbf16>
    %cst_10 = arith.constant dense<0.000000e+00> : vector<32x32xf32>
    %10 = tpu.matmul %9, %8, %cst_10 {dimension_numbers = #tpu.dot_dimension_numbers<[1], [0], [0], [1], [0, 0, 1, 1], [], []>} : vector<32x16xbf16>, vector<16x32xbf16>, vector<32x32xf32> -> vector<32x32xf32>
    %c0_11 = arith.constant 0 : index
    %c0_12 = arith.constant 0 : index
    %11 = vector.load %arg3[%c0_11, %c0_12] : memref<32x16xbf16, #tpu.memory_space<vmem>>, vector<32x16xbf16>
    %cst_13 = arith.constant dense<0.000000e+00> : vector<32x32xf32>
    %12 = tpu.matmul %11, %8, %cst_13 {dimension_numbers = #tpu.dot_dimension_numbers<[1], [0], [0], [1], [0, 0, 1, 1], [], []>} : vector<32x16xbf16>, vector<16x32xbf16>, vector<32x32xf32> -> vector<32x32xf32>
    %c0_14 = arith.constant 0 : index
    %c0_15 = arith.constant 0 : index
    %13 = vector.load %arg7[%c0_14, %c0_15] : memref<96x32xbf16, #tpu.memory_space<vmem>>, vector<96x32xbf16>
    %14 = arith.truncf %7 : vector<32x32xf32> to vector<32x32xbf16>
    %15 = vector.extract_strided_slice %13 {offsets = [0, 0], sizes = [32, 32], strides = [1, 1]} : vector<96x32xbf16> to vector<32x32xbf16>
    %cst_16 = arith.constant dense<0.000000e+00> : vector<32x32xf32>
    %16 = tpu.matmul %14, %15, %cst_16 {dimension_numbers = #tpu.dot_dimension_numbers<[1], [0], [0], [1], [0, 0, 1, 1], [], []>} : vector<32x32xbf16>, vector<32x32xbf16>, vector<32x32xf32> -> vector<32x32xf32>
    %17 = arith.truncf %10 : vector<32x32xf32> to vector<32x32xbf16>
    %18 = vector.extract_strided_slice %13 {offsets = [32, 0], sizes = [32, 32], strides = [1, 1]} : vector<96x32xbf16> to vector<32x32xbf16>
    %cst_17 = arith.constant dense<0.000000e+00> : vector<32x32xf32>
    %19 = tpu.matmul %17, %18, %cst_17 {dimension_numbers = #tpu.dot_dimension_numbers<[1], [0], [0], [1], [0, 0, 1, 1], [], []>} : vector<32x32xbf16>, vector<32x32xbf16>, vector<32x32xf32> -> vector<32x32xf32>
    %20 = arith.addf %16, %19 : vector<32x32xf32>
    %21 = arith.truncf %12 : vector<32x32xf32> to vector<32x32xbf16>
    %22 = vector.extract_strided_slice %13 {offsets = [64, 0], sizes = [32, 32], strides = [1, 1]} : vector<96x32xbf16> to vector<32x32xbf16>
    %cst_18 = arith.constant dense<0.000000e+00> : vector<32x32xf32>
    %23 = tpu.matmul %21, %22, %cst_18 {dimension_numbers = #tpu.dot_dimension_numbers<[1], [0], [0], [1], [0, 0, 1, 1], [], []>} : vector<32x32xbf16>, vector<32x32xbf16>, vector<32x32xf32> -> vector<32x32xf32>
    %24 = arith.addf %20, %23 : vector<32x32xf32>
    %c0_19 = arith.constant 0 : index
    %c0_20 = arith.constant 0 : index
    %25 = vector.load %arg8[%c0_19, %c0_20] : memref<8x32xf32, #tpu.memory_space<vmem>>, vector<1x32xf32>
    %26 = vector.broadcast %25 : vector<1x32xf32> to vector<32x32xf32>
    %27 = arith.addf %24, %26 : vector<32x32xf32>
    %c1 = arith.constant 1 : index
    %c0_21 = arith.constant 0 : index
    %28 = vector.load %arg8[%c1, %c0_21] : memref<8x32xf32, #tpu.memory_space<vmem>>, vector<1x32xf32>
    %29 = vector.broadcast %28 : vector<1x32xf32> to vector<32x32xf32>
    %30 = arith.mulf %7, %29 : vector<32x32xf32>
    %c2 = arith.constant 2 : index
    %c0_22 = arith.constant 0 : index
    %31 = vector.load %arg8[%c2, %c0_22] : memref<8x32xf32, #tpu.memory_space<vmem>>, vector<1x32xf32>
    %32 = vector.broadcast %31 : vector<1x32xf32> to vector<32x32xf32>
    %33 = arith.mulf %10, %32 : vector<32x32xf32>
    %34 = arith.addf %30, %33 : vector<32x32xf32>
    %c3 = arith.constant 3 : index
    %c0_23 = arith.constant 0 : index
    %35 = vector.load %arg8[%c3, %c0_23] : memref<8x32xf32, #tpu.memory_space<vmem>>, vector<1x32xf32>
    %36 = vector.broadcast %35 : vector<1x32xf32> to vector<32x32xf32>
    %37 = arith.mulf %12, %36 : vector<32x32xf32>
    %38 = arith.addf %34, %37 : vector<32x32xf32>
    %39 = tpu.iota {dimensions = array<i32: 0>} : vector<32x4xi32>
    %40 = tpu.iota {dimensions = array<i32: 1>} : vector<32x4xi32>
    %c8_i32 = arith.constant 8 : i32
    %41 = vector.broadcast %c8_i32 : i32 to vector<32x4xi32>
    %42 = arith.muli %40, %41 : vector<32x4xi32>
    %43 = arith.cmpi sge, %39, %42 : vector<32x4xi32>
    %c1_i32 = arith.constant 1 : i32
    %44 = vector.broadcast %c1_i32 : i32 to vector<32x4xi32>
    %45 = arith.addi %40, %44 : vector<32x4xi32>
    %c8_i32_24 = arith.constant 8 : i32
    %46 = vector.broadcast %c8_i32_24 : i32 to vector<32x4xi32>
    %47 = arith.muli %45, %46 : vector<32x4xi32>
    %48 = arith.cmpi slt, %39, %47 : vector<32x4xi32>
    %49 = arith.andi %43, %48 : vector<32x4xi1>
    %50 = arith.extui %49 : vector<32x4xi1> to vector<32x4xi32>
    %51 = arith.sitofp %50 : vector<32x4xi32> to vector<32x4xf32>
    %cst_25 = arith.constant dense<0.000000e+00> : vector<32x4xf32>
    %52 = tpu.matmul %38, %51, %cst_25 {dimension_numbers = #tpu.dot_dimension_numbers<[1], [0], [0], [1], [0, 0, 1, 1], [], []>} : vector<32x32xf32>, vector<32x4xf32>, vector<32x4xf32> -> vector<32x4xf32>
    %cst_26 = arith.constant 0.000000e+00 : f32
    %53 = vector.broadcast %cst_26 : f32 to vector<32x4xf32>
    %54 = arith.cmpf ogt, %52, %53 : vector<32x4xf32>
    %cst_27 = arith.constant 0.00999999977 : f32
    %55 = vector.broadcast %cst_27 : f32 to vector<32x4xf32>
    %56 = arith.mulf %55, %52 : vector<32x4xf32>
    %57 = arith.select %54, %52, %56 : vector<32x4xi1>, vector<32x4xf32>
    %cst_28 = arith.constant dense<0xFF800000> : vector<32xf32>
    %58 = vector.multi_reduction <maximumf>, %57, %cst_28 [1] : vector<32x4xf32> to vector<32xf32>
    %59 = vector.shape_cast %58 : vector<32xf32> to vector<32x1xf32>
    %cst_29 = arith.constant dense<0xFF800000> : vector<1xf32>
    %60 = vector.multi_reduction <maximumf>, %59, %cst_29 [0] : vector<32x1xf32> to vector<1xf32>
    %61 = vector.shape_cast %60 : vector<1xf32> to vector<1x1xf32>
    %62 = vector.broadcast %61 : vector<1x1xf32> to vector<32x4xf32>
    %63 = arith.subf %57, %62 : vector<32x4xf32>
    %64 = math.exp %63 : vector<32x4xf32>
    %65 = tpu.iota {dimensions = array<i32: 0>} : vector<4x32xi32>
    %66 = tpu.iota {dimensions = array<i32: 1>} : vector<4x32xi32>
    %c8_i32_30 = arith.constant 8 : i32
    %67 = vector.broadcast %c8_i32_30 : i32 to vector<4x32xi32>
    %68 = arith.muli %65, %67 : vector<4x32xi32>
    %69 = arith.cmpi sge, %66, %68 : vector<4x32xi32>
    %c1_i32_31 = arith.constant 1 : i32
    %70 = vector.broadcast %c1_i32_31 : i32 to vector<4x32xi32>
    %71 = arith.addi %65, %70 : vector<4x32xi32>
    %c8_i32_32 = arith.constant 8 : i32
    %72 = vector.broadcast %c8_i32_32 : i32 to vector<4x32xi32>
    %73 = arith.muli %71, %72 : vector<4x32xi32>
    %74 = arith.cmpi slt, %66, %73 : vector<4x32xi32>
    %75 = arith.andi %69, %74 : vector<4x32xi1>
    %76 = arith.extui %75 : vector<4x32xi1> to vector<4x32xi32>
    %77 = arith.sitofp %76 : vector<4x32xi32> to vector<4x32xf32>
    %cst_33 = arith.constant dense<0.000000e+00> : vector<32x32xf32>
    %78 = tpu.matmul %64, %77, %cst_33 {dimension_numbers = #tpu.dot_dimension_numbers<[1], [0], [0], [1], [0, 0, 1, 1], [], []>} : vector<32x4xf32>, vector<4x32xf32>, vector<32x32xf32> -> vector<32x32xf32>
    %c0_34 = arith.constant 0 : index
    %c0_35 = arith.constant 0 : index
    %79 = vector.load %arg4[%c0_34, %c0_35] : memref<16x32xbf16, #tpu.memory_space<vmem>>, vector<16x32xbf16>
    %80 = arith.mulf %78, %10 : vector<32x32xf32>
    %81 = arith.truncf %80 : vector<32x32xf32> to vector<32x32xbf16>
    %cst_36 = arith.constant dense<0.000000e+00> : vector<16x32xf32>
    %82 = tpu.matmul %79, %81, %cst_36 {dimension_numbers = #tpu.dot_dimension_numbers<[1], [0], [0], [1], [0, 0, 1, 1], [], []>} : vector<16x32xbf16>, vector<32x32xbf16>, vector<16x32xf32> -> vector<16x32xf32>
    %83 = arith.truncf %78 : vector<32x32xf32> to vector<32x32xbf16>
    %cst_37 = arith.constant dense<0.000000e+00> : vector<16x32xf32>
    %84 = tpu.matmul %79, %83, %cst_37 {dimension_numbers = #tpu.dot_dimension_numbers<[1], [0], [0], [1], [0, 0, 1, 1], [], []>} : vector<16x32xbf16>, vector<32x32xbf16>, vector<16x32xf32> -> vector<16x32xf32>
    %cst_38 = arith.constant 9.99999968E-21 : f32
    %85 = vector.broadcast %cst_38 : f32 to vector<16x32xf32>
    %86 = arith.maximumf %84, %85 : vector<16x32xf32>
    %87 = tpu.reciprocal %86 {approx = true} : vector<16x32xf32> -> vector<16x32xf32>
    %88 = arith.mulf %82, %87 : vector<16x32xf32>
    %c4 = arith.constant 4 : index
    %c0_39 = arith.constant 0 : index
    %89 = vector.load %arg8[%c4, %c0_39] : memref<8x32xf32, #tpu.memory_space<vmem>>, vector<1x32xf32>
    %c5 = arith.constant 5 : index
    %c0_40 = arith.constant 0 : index
    %90 = vector.load %arg8[%c5, %c0_40] : memref<8x32xf32, #tpu.memory_space<vmem>>, vector<1x32xf32>
    %cst_41 = arith.constant dense<0.000000e+00> : vector<32xf32>
    %91 = vector.multi_reduction <add>, %88, %cst_41 [0] : vector<16x32xf32> to vector<32xf32>
    %92 = vector.shape_cast %91 : vector<32xf32> to vector<1x32xf32>
    %cst_42 = arith.constant 6.250000e-02 : f32
    %93 = vector.broadcast %cst_42 : f32 to vector<1x32xf32>
    %94 = arith.mulf %92, %93 : vector<1x32xf32>
    %95 = vector.broadcast %94 : vector<1x32xf32> to vector<16x32xf32>
    %96 = arith.subf %88, %95 : vector<16x32xf32>
    %97 = arith.mulf %96, %96 : vector<16x32xf32>
    %cst_43 = arith.constant dense<0.000000e+00> : vector<32xf32>
    %98 = vector.multi_reduction <add>, %97, %cst_43 [0] : vector<16x32xf32> to vector<32xf32>
    %99 = vector.shape_cast %98 : vector<32xf32> to vector<1x32xf32>
    %cst_44 = arith.constant 6.250000e-02 : f32
    %100 = vector.broadcast %cst_44 : f32 to vector<1x32xf32>
    %101 = arith.mulf %99, %100 : vector<1x32xf32>
    %cst_45 = arith.constant 9.99999974E-6 : f32
    %102 = vector.broadcast %cst_45 : f32 to vector<1x32xf32>
    %103 = arith.addf %101, %102 : vector<1x32xf32>
    %104 = math.rsqrt %103 : vector<1x32xf32>
    %105 = vector.broadcast %104 : vector<1x32xf32> to vector<16x32xf32>
    %106 = arith.mulf %96, %105 : vector<16x32xf32>
    %107 = vector.broadcast %89 : vector<1x32xf32> to vector<16x32xf32>
    %108 = arith.mulf %106, %107 : vector<16x32xf32>
    %109 = vector.broadcast %90 : vector<1x32xf32> to vector<16x32xf32>
    %110 = arith.addf %108, %109 : vector<16x32xf32>
    %cst_46 = arith.constant 0.000000e+00 : f32
    %111 = vector.broadcast %cst_46 : f32 to vector<16x32xf32>
    %112 = arith.cmpf ogt, %110, %111 : vector<16x32xf32>
    %cst_47 = arith.constant 0.000000e+00 : f32
    %113 = vector.broadcast %cst_47 : f32 to vector<16x32xf32>
    %114 = arith.minimumf %110, %113 : vector<16x32xf32>
    %115 = math.exp %114 : vector<16x32xf32>
    %cst_48 = arith.constant 1.000000e+00 : f32
    %116 = vector.broadcast %cst_48 : f32 to vector<16x32xf32>
    %117 = arith.subf %115, %116 : vector<16x32xf32>
    %118 = arith.select %112, %110, %117 : vector<16x32xi1>, vector<16x32xf32>
    %c6 = arith.constant 6 : index
    %c0_49 = arith.constant 0 : index
    %119 = vector.load %arg8[%c6, %c0_49] : memref<8x32xf32, #tpu.memory_space<vmem>>, vector<1x32xf32>
    %c7 = arith.constant 7 : index
    %c0_50 = arith.constant 0 : index
    %120 = vector.load %arg8[%c7, %c0_50] : memref<8x32xf32, #tpu.memory_space<vmem>>, vector<1x32xf32>
    %cst_51 = arith.constant dense<0.000000e+00> : vector<32xf32>
    %121 = vector.multi_reduction <add>, %27, %cst_51 [0] : vector<32x32xf32> to vector<32xf32>
    %122 = vector.shape_cast %121 : vector<32xf32> to vector<1x32xf32>
    %cst_52 = arith.constant 3.125000e-02 : f32
    %123 = vector.broadcast %cst_52 : f32 to vector<1x32xf32>
    %124 = arith.mulf %122, %123 : vector<1x32xf32>
    %125 = vector.broadcast %124 : vector<1x32xf32> to vector<32x32xf32>
    %126 = arith.subf %27, %125 : vector<32x32xf32>
    %127 = arith.mulf %126, %126 : vector<32x32xf32>
    %cst_53 = arith.constant dense<0.000000e+00> : vector<32xf32>
    %128 = vector.multi_reduction <add>, %127, %cst_53 [0] : vector<32x32xf32> to vector<32xf32>
    %129 = vector.shape_cast %128 : vector<32xf32> to vector<1x32xf32>
    %cst_54 = arith.constant 3.125000e-02 : f32
    %130 = vector.broadcast %cst_54 : f32 to vector<1x32xf32>
    %131 = arith.mulf %129, %130 : vector<1x32xf32>
    %cst_55 = arith.constant 9.99999974E-6 : f32
    %132 = vector.broadcast %cst_55 : f32 to vector<1x32xf32>
    %133 = arith.addf %131, %132 : vector<1x32xf32>
    %134 = math.rsqrt %133 : vector<1x32xf32>
    %135 = vector.broadcast %134 : vector<1x32xf32> to vector<32x32xf32>
    %136 = arith.mulf %126, %135 : vector<32x32xf32>
    %137 = vector.broadcast %119 : vector<1x32xf32> to vector<32x32xf32>
    %138 = arith.mulf %136, %137 : vector<32x32xf32>
    %139 = vector.broadcast %120 : vector<1x32xf32> to vector<32x32xf32>
    %140 = arith.addf %138, %139 : vector<32x32xf32>
    %cst_56 = arith.constant 0.000000e+00 : f32
    %141 = vector.broadcast %cst_56 : f32 to vector<32x32xf32>
    %142 = arith.cmpf ogt, %140, %141 : vector<32x32xf32>
    %cst_57 = arith.constant 0.000000e+00 : f32
    %143 = vector.broadcast %cst_57 : f32 to vector<32x32xf32>
    %144 = arith.minimumf %140, %143 : vector<32x32xf32>
    %145 = math.exp %144 : vector<32x32xf32>
    %cst_58 = arith.constant 1.000000e+00 : f32
    %146 = vector.broadcast %cst_58 : f32 to vector<32x32xf32>
    %147 = arith.subf %145, %146 : vector<32x32xf32>
    %148 = arith.select %142, %140, %147 : vector<32x32xi1>, vector<32x32xf32>
    %149 = arith.addf %118, %0 : vector<16x32xf32>
    %150 = arith.addf %148, %1 : vector<32x32xf32>
    %c0_59 = arith.constant 0 : index
    %c0_60 = arith.constant 0 : index
    %151 = vector.load %arg9[%c0_59, %c0_60] : memref<16x32xf32, #tpu.memory_space<vmem>>, vector<16x32xf32>
    tpu.vector_store %arg9[%c0_59, %c0_60], %149 {strides = array<i32>} : memref<16x32xf32, #tpu.memory_space<vmem>>, vector<16x32xf32>,
    %c0_61 = arith.constant 0 : index
    %c0_62 = arith.constant 0 : index
    %152 = vector.load %arg10[%c0_61, %c0_62] : memref<32x32xf32, #tpu.memory_space<vmem>>, vector<32x32xf32>
    tpu.vector_store %arg10[%c0_61, %c0_62], %150 {strides = array<i32>} : memref<32x32xf32, #tpu.memory_space<vmem>>, vector<32x32xf32>,
    return
  }
}

</mosaic_0001>

<llo_original>
// kernel: tpu_custom_call.1
$region0: #{tpu_custom_call.1}
  #allocation0 [shape = 'u32[]', space=smem, size = 0x4, offset = 0x4, fixed_abs, tag = 'smem constant byte address 0x4 - core index']
  #allocation1 [shape = 'u32[144,128]{1,0:T(1,128)}', space=vmem, size = 0x12000, scoped, tag = 'internal scratch']
  %s0 = inlined_call_operand.hbm [shape: f32[16,32], index: 0, kind: input, shape index: {}]
  %s1 = inlined_call_operand.hbm [shape: f32[32,32], index: 1, kind: input, shape index: {}]
  %s2 = inlined_call_operand.hbm [shape: bf16[32,16], index: 2, kind: input, shape index: {}]
  %s3 = inlined_call_operand.hbm [shape: bf16[32,16], index: 3, kind: input, shape index: {}]
  %s4 = inlined_call_operand.hbm [shape: bf16[16,32], index: 4, kind: input, shape index: {}]
  %s5 = inlined_call_operand.hbm [shape: bf16[32,32], index: 5, kind: input, shape index: {}]
  %s6 = inlined_call_operand.hbm [shape: bf16[32,32], index: 6, kind: input, shape index: {}]
  %s7 = inlined_call_operand.hbm [shape: bf16[96,32], index: 7, kind: input, shape index: {}]
  %s8 = inlined_call_operand.hbm [shape: f32[8,32], index: 8, kind: input, shape index: {}]
  %s9 = inlined_call_operand.hbm [shape: f32[16,32], index: 9, kind: output, shape index: {0}]
  %s10 = inlined_call_operand.hbm [shape: f32[32,32], index: 10, kind: output, shape index: {1}]
  %11 = xla_tuple %s9, %s10
  %s12 = sld [smem:[#allocation0]]
  $region90: #{tpu_custom_call.1} parent=0
    _
  %s14 = ssub.s32 1, %s12
  %s15 = scalar_select 0, %s14, %s12
  $region1: #{tpu_custom_call.1} parent=0
    #allocation2 [shape = 'u8[8192]{0}', space=vmem, size = 0x2000, scoped, tag = 'input window, operand 0, single buffered']
    #allocation3 [shape = 's32[1]{0}', space=sflag, size = 0x4, scoped, tag = 'scoped memory for tpu_custom_call.1']
    #allocation4 [shape = 's32[1]{0}', space=sflag, size = 0x4, scoped, tag = 'scoped memory for tpu_custom_call.1']
    #allocation5 [shape = 'u8[16384]{0}', space=vmem, size = 0x4000, scoped, tag = 'input window, operand 1, single buffered']
    #allocation6 [shape = 's32[1]{0}', space=sflag, size = 0x4, scoped, tag = 'scoped memory for tpu_custom_call.1']
    #allocation7 [shape = 'u8[8192]{0}', space=vmem, size = 0x2000, scoped, tag = 'input window, operand 2, single buffered']
    #allocation8 [shape = 'u8[8192]{0}', space=vmem, size = 0x2000, scoped, tag = 'input window, operand 3, single buffered']
    #allocation9 [shape = 's32[1]{0}', space=sflag, size = 0x4, scoped, tag = 'scoped memory for tpu_custom_call.1']
    #allocation10 [shape = 'u8[4096]{0}', space=vmem, size = 0x1000, scoped, tag = 'input window, operand 4, single buffered']
    #allocation11 [shape = 'u8[8192]{0}', space=vmem, size = 0x2000, scoped, tag = 'input window, operand 5, single buffered']
    #allocation12 [shape = 's32[1]{0}', space=sflag, size = 0x4, scoped, tag = 'scoped memory for tpu_custom_call.1']
    #allocation13 [shape = 'u8[8192]{0}', space=vmem, size = 0x2000, scoped, tag = 'input window, operand 6, single buffered']
    #allocation14 [shape = 'u8[24576]{0}', space=vmem, size = 0x6000, scoped, tag = 'input window, operand 7, single buffered']
    #allocation15 [shape = 's32[1]{0}', space=sflag, size = 0x4, scoped, tag = 'scoped memory for tpu_custom_call.1']
    #allocation16 [shape = 'u8[4096]{0}', space=vmem, size = 0x1000, scoped, tag = 'input window, operand 8, single buffered']
    #allocation17 [shape = 'u8[8192]{0}', space=vmem, size = 0x2000, scoped, tag = 'output window, operand 0, single buffered']
    #allocation18 [shape = 'u8[16384]{0}', space=vmem, size = 0x4000, scoped, tag = 'output window, operand 1, single buffered']
    #allocation19 [shape = 's32[1]{0}', space=sflag, size = 0x4, scoped, tag = 'scoped memory for tpu_custom_call.1']
    %16 = vsyncpa [#allocation3], 0
    %17 = vsyncpa [#allocation6], 0
    %18 = vsyncpa [#allocation9], 0
    %19 = vsyncpa [#allocation12], 0
    %20 = vsyncpa [#allocation15], 0
    %21 = vsyncpa [#allocation4], 0
    %22 = vsyncpa [#allocation19], 0
    // Predicated region
    $region2: #{tpu_custom_call.1} parent=1 // pred_check
      _
    $region3: #{tpu_custom_call.1} parent=1 // pred_check_branch
      %24 = sbr.rel (0) target = $region5
    $region4: #{tpu_custom_call.1} parent=1 // pred_region
      %s26 = ssub.s32 256, 256
      %27 = vsyncadd [#allocation3], %s26
      %s28 = sshll.u32 [#allocation2], 4
      %s29 = int_to_ptr.vmem [resolvable:$true] %s28
      %34 = dma.hbm_to_vmem [thread:$0]  %s0, 256, %s29, [#allocation3], 128, 128, 8
    $region5: #{tpu_custom_call.1} parent=1 // pred_fallthru
      _
    // Predicated region
    $region6: #{tpu_custom_call.1} parent=1 // pred_check
      _
    $region7: #{tpu_custom_call.1} parent=1 // pred_check_branch
      %36 = sbr.rel (0) target = $region9
    $region8: #{tpu_custom_call.1} parent=1 // pred_region
      %s38 = ssub.s32 512, 512
      %39 = vsyncadd [#allocation6], %s38
      %s40 = sshll.u32 [#allocation5], 4
      %s41 = int_to_ptr.vmem [resolvable:$true] %s40
      %46 = dma.hbm_to_vmem [thread:$0]  %s1, 512, %s41, [#allocation6], 128, 128, 8
    $region9: #{tpu_custom_call.1} parent=1 // pred_fallthru
      _
    // Predicated region
    $region10: #{tpu_custom_call.1} parent=1 // pred_check
      _
    $region11: #{tpu_custom_call.1} parent=1 // pred_check_branch
      %48 = sbr.rel (0) target = $region13
    $region12: #{tpu_custom_call.1} parent=1 // pred_region
      %s50 = ssub.s32 256, 256
      %51 = vsyncadd [#allocation6], %s50
      %s52 = sshll.u32 [#allocation7], 4
      %s53 = int_to_ptr.vmem [resolvable:$true] %s52
      %58 = dma.hbm_to_vmem [thread:$0]  %s2, 256, %s53, [#allocation6], 64, 64, 4
    $region13: #{tpu_custom_call.1} parent=1 // pred_fallthru
      _
    // Predicated region
    $region14: #{tpu_custom_call.1} parent=1 // pred_check
      _
    $region15: #{tpu_custom_call.1} parent=1 // pred_check_branch
      %60 = sbr.rel (0) target = $region17
    $region16: #{tpu_custom_call.1} parent=1 // pred_region
      %s62 = ssub.s32 256, 256
      %63 = vsyncadd [#allocation9], %s62
      %s64 = sshll.u32 [#allocation8], 4
      %s65 = int_to_ptr.vmem [resolvable:$true] %s64
      %70 = dma.hbm_to_vmem [thread:$0]  %s3, 256, %s65, [#allocation9], 64, 64, 4
    $region17: #{tpu_custom_call.1} parent=1 // pred_fallthru
      _
    // Predicated region
    $region18: #{tpu_custom_call.1} parent=1 // pred_check
      _
    $region19: #{tpu_custom_call.1} parent=1 // pred_check_branch
      %72 = sbr.rel (0) target = $region21
    $region20: #{tpu_custom_call.1} parent=1 // pred_region
      %s74 = ssub.s32 128, 128
      %75 = vsyncadd [#allocation9], %s74
      %s76 = sshll.u32 [#allocation10], 4
      %s77 = int_to_ptr.vmem [resolvable:$true] %s76
      %82 = dma.hbm_to_vmem [thread:$0]  %s4, 128, %s77, [#allocation9], 64, 64, 4
    $region21: #{tpu_custom_call.1} parent=1 // pred_fallthru
      _
    // Predicated region
    $region22: #{tpu_custom_call.1} parent=1 // pred_check
      _
    $region23: #{tpu_custom_call.1} parent=1 // pred_check_branch
      %84 = sbr.rel (0) target = $region25
    $region24: #{tpu_custom_call.1} parent=1 // pred_region
      %s86 = ssub.s32 256, 256
      %87 = vsyncadd [#allocation12], %s86
      %s88 = sshll.u32 [#allocation11], 4
      %s89 = int_to_ptr.vmem [resolvable:$true] %s88
      %94 = dma.hbm_to_vmem [thread:$0]  %s5, 256, %s89, [#allocation12], 64, 64, 4
    $region25: #{tpu_custom_call.1} parent=1 // pred_fallthru
      _
    // Predicated region
    $region26: #{tpu_custom_call.1} parent=1 // pred_check
      _
    $region27: #{tpu_custom_call.1} parent=1 // pred_check_branch
      %96 = sbr.rel (0) target = $region29
    $region28: #{tpu_custom_call.1} parent=1 // pred_region
      %s98 = ssub.s32 256, 256
      %99 = vsyncadd [#allocation12], %s98
      %s100 = sshll.u32 [#allocation13], 4
      %s101 = int_to_ptr.vmem [resolvable:$true] %s100
      %106 = dma.hbm_to_vmem [thread:$0]  %s6, 256, %s101, [#allocation12], 64, 64, 4
    $region29: #{tpu_custom_call.1} parent=1 // pred_fallthru
      _
    // Predicated region
    $region30: #{tpu_custom_call.1} parent=1 // pred_check
      _
    $region31: #{tpu_custom_call.1} parent=1 // pred_check_branch
      %108 = sbr.rel (0) target = $region33
    $region32: #{tpu_custom_call.1} parent=1 // pred_region
      %s110 = ssub.s32 768, 768
      %111 = vsyncadd [#allocation15], %s110
      %s112 = sshll.u32 [#allocation14], 4
      %s113 = int_to_ptr.vmem [resolvable:$true] %s112
      %118 = dma.hbm_to_vmem [thread:$0]  %s7, 768, %s113, [#allocation15], 64, 64, 4
    $region33: #{tpu_custom_call.1} parent=1 // pred_fallthru
      _
    // Predicated region
    $region34: #{tpu_custom_call.1} parent=1 // pred_check
      _
    $region35: #{tpu_custom_call.1} parent=1 // pred_check_branch
      %120 = sbr.rel (0) target = $region37
    $region36: #{tpu_custom_call.1} parent=1 // pred_region
      %s122 = ssub.s32 128, 128
      %123 = vsyncadd [#allocation15], %s122
      %s125 = sshll.u32 [#allocation16], 4
      %s126 = int_to_ptr.vmem [resolvable:$true] %s125
      %128 = dma.hbm_to_vmem [thread:$0]  %s8, 128, %s126, [#allocation15]
    $region37: #{tpu_custom_call.1} parent=1 // pred_fallthru
      _
    // Predicated region
    $region38: #{tpu_custom_call.1} parent=1 // pred_check
      _
    $region39: #{tpu_custom_call.1} parent=1 // pred_check_branch
      %130 = sbr.rel (0) target = $region41
    $region40: #{tpu_custom_call.1} parent=1 // pred_region
      %131 = dma.done [#allocation3], 256
    $region41: #{tpu_custom_call.1} parent=1 // pred_fallthru
      _
    // Predicated region
    $region42: #{tpu_custom_call.1} parent=1 // pred_check
      _
    $region43: #{tpu_custom_call.1} parent=1 // pred_check_branch
      %133 = sbr.rel (0) target = $region45
    $region44: #{tpu_custom_call.1} parent=1 // pred_region
      %134 = dma.done [#allocation6], 512
    $region45: #{tpu_custom_call.1} parent=1 // pred_fallthru
      _
    // Predicated region
    $region46: #{tpu_custom_call.1} parent=1 // pred_check
      _
    $region47: #{tpu_custom_call.1} parent=1 // pred_check_branch
      %136 = sbr.rel (0) target = $region49
    $region48: #{tpu_custom_call.1} parent=1 // pred_region
      %137 = dma.done [#allocation6], 256
    $region49: #{tpu_custom_call.1} parent=1 // pred_fallthru
      _
    // Predicated region
    $region50: #{tpu_custom_call.1} parent=1 // pred_check
      _
    $region51: #{tpu_custom_call.1} parent=1 // pred_check_branch
      %139 = sbr.rel (0) target = $region53
    $region52: #{tpu_custom_call.1} parent=1 // pred_region
      %140 = dma.done [#allocation9], 256
    $region53: #{tpu_custom_call.1} parent=1 // pred_fallthru
      _
    // Predicated region
    $region54: #{tpu_custom_call.1} parent=1 // pred_check
      _
    $region55: #{tpu_custom_call.1} parent=1 // pred_check_branch
      %142 = sbr.rel (0) target = $region57
    $region56: #{tpu_custom_call.1} parent=1 // pred_region
      %143 = dma.done [#allocation9], 128
    $region57: #{tpu_custom_call.1} parent=1 // pred_fallthru
      _
    // Predicated region
    $region58: #{tpu_custom_call.1} parent=1 // pred_check
      _
    $region59: #{tpu_custom_call.1} parent=1 // pred_check_branch
      %145 = sbr.rel (0) target = $region61
    $region60: #{tpu_custom_call.1} parent=1 // pred_region
      %146 = dma.done [#allocation12], 256
    $region61: #{tpu_custom_call.1} parent=1 // pred_fallthru
      _
    // Predicated region
    $region62: #{tpu_custom_call.1} parent=1 // pred_check
      _
    $region63: #{tpu_custom_call.1} parent=1 // pred_check_branch
      %148 = sbr.rel (0) target = $region65
    $region64: #{tpu_custom_call.1} parent=1 // pred_region
      %149 = dma.done [#allocation12], 256
    $region65: #{tpu_custom_call.1} parent=1 // pred_fallthru
      _
    // Predicated region
    $region66: #{tpu_custom_call.1} parent=1 // pred_check
      _
    $region67: #{tpu_custom_call.1} parent=1 // pred_check_branch
      %151 = sbr.rel (0) target = $region69
    $region68: #{tpu_custom_call.1} parent=1 // pred_region
      %152 = dma.done [#allocation15], 768
    $region69: #{tpu_custom_call.1} parent=1 // pred_fallthru
      _
    // Predicated region
    $region70: #{tpu_custom_call.1} parent=1 // pred_check
      _
    $region71: #{tpu_custom_call.1} parent=1 // pred_check_branch
      %154 = sbr.rel (0) target = $region73
    $region72: #{tpu_custom_call.1} parent=1 // pred_region
      %155 = dma.done [#allocation15], 128
    $region73: #{tpu_custom_call.1} parent=1 // pred_fallthru
      _
    %v157 = vld [vmem:[#allocation2] sm:$0xff]
    %v158 = vld [vmem:[#allocation2 + $0x8] sm:$0xff]
    %v159 = vld [vmem:[#allocation5] sm:$0xff]
    %v160 = vld [vmem:[#allocation5 + $0x8] sm:$0xff]
    %v161 = vld [vmem:[#allocation5 + $0x10] sm:$0xff]
    %v162 = vld [vmem:[#allocation5 + $0x18] sm:$0xff]
    %v163 = vpack.c.bf16 %v158, %v157
    %v164 = vpack.c.bf16 %v160, %v159
    %v165 = vpack.c.bf16 %v162, %v161
    %v166 = vld [vmem:[#allocation11] sm:$0xf]
    %v167 = vld [vmem:[#allocation11 + $0x4] sm:$0xf]
    %v168 = vld [vmem:[#allocation11 + $0x8] sm:$0xf]
    %v169 = vld [vmem:[#allocation11 + $0xc] sm:$0xf]
    %v174 = vunpack.c.l.b16 %v166
    %v175 = vunpack.c.l.b16 %v167
    %v176 = vunpack.c.l.b16 %v168
    %v177 = vunpack.c.l.b16 %v169
    %v178 = vpack.c.b16 %v175, %v174
    %v179 = vpack.c.b16 %v177, %v176
    %vm182 = vcmask 261120
    %v184 = vsel %vm182, %v163, 0
    %186 = vmatprep.subr.bf16.mxu0 0
    %187 = vmatpush1.bf16.msra.mxu0 %v178
    %188 = vmatprep.subr.bf16.mxu0 0
    %189 = vmatpush1.bf16.msra.mxu0 %v179
    %190 = vmatprep.subr.bf16.mxu0 0
    %191 = vmatpush1.bf16.msra.mxu0 0
    %192 = vmatprep.subr.bf16.mxu0 0
    %193 = vmatpush1.bf16.msra.mxu0 0
    %194 = vmatprep.subr.bf16.mxu0 0
    %195 = vmatpush1.bf16.msra.mxu0 0
    %196 = vmatprep.subr.bf16.mxu0 0
    %197 = vmatpush1.bf16.msra.mxu0 0
    %198 = vmatprep.subr.bf16.mxu0 0
    %199 = vmatpush1.bf16.msra.mxu0 0
    %200 = vmatprep.subr.bf16.mxu0 0
    %201 = vmatpush1.bf16.msra.mxu0 0
    %202 = vmatprep.subr.bf16.mxu0 0
    %203 = vmatpush1.bf16.msra.mxu0 0
    %204 = vmatprep.subr.bf16.mxu0 0
    %205 = vmatpush1.bf16.msra.mxu0 0
    %206 = vmatprep.subr.bf16.mxu0 0
    %207 = vmatpush1.bf16.msra.mxu0 0
    %208 = vmatprep.subr.bf16.mxu0 0
    %209 = vmatpush1.bf16.msra.mxu0 0
    %210 = vmatprep.subr.bf16.mxu0 0
    %211 = vmatpush1.bf16.msra.mxu0 0
    %212 = vmatprep.subr.bf16.mxu0 0
    %213 = vmatpush1.bf16.msra.mxu0 0
    %214 = vmatprep.subr.bf16.mxu0 0
    %215 = vmatpush1.bf16.msra.mxu0 0
    %216 = vmatprep.subr.bf16.mxu0 0
    %217 = vmatpush1.bf16.msra.mxu0 0
    %218 = vmatprep.mubr.bf16.mxu0 0
    %219 = vmatmul.mubr.bf16.gmra.mrb[0].mxu0 %v184
    %v220 = vpop.f32.mrb[0].mxu0
    %v221 = vadd.f32 0.0, %v220
    %v222 = vpop.f32.mrb[0].mxu0
    %v223 = vpop.f32.mrb[0].mxu0
    %v224 = vadd.f32 0.0, %v223
    %v225 = vpop.f32.mrb[0].mxu0
    %226 = vdwg.mxu0
    %v227 = vld [vmem:[#allocation13] sm:$0xf]
    %v228 = vld [vmem:[#allocation13 + $0x4] sm:$0xf]
    %v229 = vld [vmem:[#allocation13 + $0x8] sm:$0xf]
    %v230 = vld [vmem:[#allocation13 + $0xc] sm:$0xf]
    %v235 = vunpack.c.l.b16 %v227
    %v236 = vunpack.c.l.b16 %v228
    %v237 = vunpack.c.l.b16 %v229
    %v238 = vunpack.c.l.b16 %v230
    %v239 = vpack.c.b16 %v236, %v235
    %v240 = vpack.c.b16 %v238, %v237
    %v244 = vsel %vm182, %v164, 0
    %v247 = vsel %vm182, %v165, 0
    %249 = vmatprep.subr.bf16.mxu0 0
    %250 = vmatpush1.bf16.msra.mxu0 %v239
    %251 = vmatprep.subr.bf16.mxu0 0
    %252 = vmatpush1.bf16.msra.mxu0 %v240
    %253 = vmatprep.subr.bf16.mxu0 0
    %254 = vmatpush1.bf16.msra.mxu0 0
    %255 = vmatprep.subr.bf16.mxu0 0
    %256 = vmatpush1.bf16.msra.mxu0 0
    %257 = vmatprep.subr.bf16.mxu0 0
    %258 = vmatpush1.bf16.msra.mxu0 0
    %259 = vmatprep.subr.bf16.mxu0 0
    %260 = vmatpush1.bf16.msra.mxu0 0
    %261 = vmatprep.subr.bf16.mxu0 0
    %262 = vmatpush1.bf16.msra.mxu0 0
    %263 = vmatprep.subr.bf16.mxu0 0
    %264 = vmatpush1.bf16.msra.mxu0 0
    %265 = vmatprep.subr.bf16.mxu0 0
    %266 = vmatpush1.bf16.msra.mxu0 0
    %267 = vmatprep.subr.bf16.mxu0 0
    %268 = vmatpush1.bf16.msra.mxu0 0
    %269 = vmatprep.subr.bf16.mxu0 0
    %270 = vmatpush1.bf16.msra.mxu0 0
    %271 = vmatprep.subr.bf16.mxu0 0
    %272 = vmatpush1.bf16.msra.mxu0 0
    %273 = vmatprep.subr.bf16.mxu0 0
    %274 = vmatpush1.bf16.msra.mxu0 0
    %275 = vmatprep.subr.bf16.mxu0 0
    %276 = vmatpush1.bf16.msra.mxu0 0
    %277 = vmatprep.subr.bf16.mxu0 0
    %278 = vmatpush1.bf16.msra.mxu0 0
    %279 = vmatprep.subr.bf16.mxu0 0
    %280 = vmatpush1.bf16.msra.mxu0 0
    %281 = vmatprep.mubr.bf16.mxu0 0
    %282 = vmatmul.mubr.bf16.gmra.mrb[0].mxu0 %v244
    %v283 = vpop.f32.mrb[0].mxu0
    %v284 = vadd.f32 0.0, %v283
    %v285 = vpop.f32.mrb[0].mxu0
    %v286 = vpop.f32.mrb[0].mxu0
    %v287 = vadd.f32 0.0, %v286
    %v288 = vpop.f32.mrb[0].mxu0
    %289 = vmatprep.mubr.bf16.mxu0 0
    %290 = vmatmul.mubr.bf16.gmra.mrb[0].mxu0 %v247
    %v291 = vpop.f32.mrb[0].mxu0
    %v292 = vadd.f32 0.0, %v291
    %v293 = vpop.f32.mrb[0].mxu0
    %v294 = vpop.f32.mrb[0].mxu0
    %v295 = vadd.f32 0.0, %v294
    %v296 = vpop.f32.mrb[0].mxu0
    %297 = vdwg.mxu0
    %v298 = vpack.c.bf16 %v224, %v221
    %v299 = vld [vmem:[#allocation7] sm:$0xf]
    %v300 = vld [vmem:[#allocation7 + $0x4] sm:$0xf]
    %v301 = vld [vmem:[#allocation7 + $0x8] sm:$0xf]
    %v302 = vld [vmem:[#allocation7 + $0xc] sm:$0xf]
    %v307 = vunpack.c.l.b16 %v299
    %v308 = vunpack.c.l.b16 %v300
    %v309 = vunpack.c.l.b16 %v301
    %v310 = vunpack.c.l.b16 %v302
    %v311 = vpack.c.b16 %v308, %v307
    %v312 = vpack.c.b16 %v310, %v309
    %vm313 = vcmask 130048
    %v315 = vsel %vm313, %v311, 0
    %v318 = vsel %vm313, %v312, 0
    %320 = vmatprep.subr.bf16.mxu0 0
    %321 = vmatpush1.bf16.msra.mxu0 %v298
    %322 = vmatprep.subr.bf16.mxu0 0
    %323 = vmatpush1.bf16.msra.mxu0 0
    %324 = vmatprep.subr.bf16.mxu0 0
    %325 = vmatpush1.bf16.msra.mxu0 0
    %326 = vmatprep.subr.bf16.mxu0 0
    %327 = vmatpush1.bf16.msra.mxu0 0
    %328 = vmatprep.subr.bf16.mxu0 0
    %329 = vmatpush1.bf16.msra.mxu0 0
    %330 = vmatprep.subr.bf16.mxu0 0
    %331 = vmatpush1.bf16.msra.mxu0 0
    %332 = vmatprep.subr.bf16.mxu0 0
    %333 = vmatpush1.bf16.msra.mxu0 0
    %334 = vmatprep.subr.bf16.mxu0 0
    %335 = vmatpush1.bf16.msra.mxu0 0
    %336 = vmatprep.subr.bf16.mxu0 0
    %337 = vmatpush1.bf16.msra.mxu0 0
    %338 = vmatprep.subr.bf16.mxu0 0
    %339 = vmatpush1.bf16.msra.mxu0 0
    %340 = vmatprep.subr.bf16.mxu0 0
    %341 = vmatpush1.bf16.msra.mxu0 0
    %342 = vmatprep.subr.bf16.mxu0 0
    %343 = vmatpush1.bf16.msra.mxu0 0
    %344 = vmatprep.subr.bf16.mxu0 0
    %345 = vmatpush1.bf16.msra.mxu0 0
    %346 = vmatprep.subr.bf16.mxu0 0
    %347 = vmatpush1.bf16.msra.mxu0 0
    %348 = vmatprep.subr.bf16.mxu0 0
    %349 = vmatpush1.bf16.msra.mxu0 0
    %350 = vmatprep.subr.bf16.mxu0 0
    %351 = vmatpush1.bf16.msra.mxu0 0
    %352 = vmatprep.mubr.bf16.mxu0 0
    %353 = vmatmul.mubr.bf16.gmra.mrb[0].mxu0 %v315
    %v354 = vpop.f32.mrb[0].mxu0
    %v355 = vadd.f32 0.0, %v354
    %v356 = vpop.f32.mrb[0].mxu0
    %v357 = vpop.f32.mrb[0].mxu0
    %v358 = vadd.f32 0.0, %v357
    %v359 = vpop.f32.mrb[0].mxu0
    %360 = vmatprep.mubr.bf16.mxu0 0
    %361 = vmatmul.mubr.bf16.gmra.mrb[0].mxu0 %v318
    %v362 = vpop.f32.mrb[0].mxu0
    %v363 = vadd.f32 0.0, %v362
    %v364 = vpop.f32.mrb[0].mxu0
    %v365 = vpop.f32.mrb[0].mxu0
    %v366 = vadd.f32 0.0, %v365
    %v367 = vpop.f32.mrb[0].mxu0
    %368 = vdwg.mxu0
    %v369 = vld [vmem:[#allocation8] sm:$0xf]
    %v370 = vld [vmem:[#allocation8 + $0x4] sm:$0xf]
    %v371 = vld [vmem:[#allocation8 + $0x8] sm:$0xf]
    %v372 = vld [vmem:[#allocation8 + $0xc] sm:$0xf]
    %v377 = vunpack.c.l.b16 %v369
    %v378 = vunpack.c.l.b16 %v370
    %v379 = vunpack.c.l.b16 %v371
    %v380 = vunpack.c.l.b16 %v372
    %v381 = vpack.c.b16 %v378, %v377
    %v382 = vpack.c.b16 %v380, %v379
    %v384 = vsel %vm313, %v381, 0
    %v387 = vsel %vm313, %v382, 0
    %389 = vmatprep.subr.bf16.mxu0 0
    %390 = vmatpush1.bf16.msra.mxu0 %v298
    %391 = vmatprep.subr.bf16.mxu0 0
    %392 = vmatpush1.bf16.msra.mxu0 0
    %393 = vmatprep.subr.bf16.mxu0 0
    %394 = vmatpush1.bf16.msra.mxu0 0
    %395 = vmatprep.subr.bf16.mxu0 0
    %396 = vmatpush1.bf16.msra.mxu0 0
    %397 = vmatprep.subr.bf16.mxu0 0
    %398 = vmatpush1.bf16.msra.mxu0 0
    %399 = vmatprep.subr.bf16.mxu0 0
    %400 = vmatpush1.bf16.msra.mxu0 0
    %401 = vmatprep.subr.bf16.mxu0 0
    %402 = vmatpush1.bf16.msra.mxu0 0
    %403 = vmatprep.subr.bf16.mxu0 0
    %404 = vmatpush1.bf16.msra.mxu0 0
    %405 = vmatprep.subr.bf16.mxu0 0
    %406 = vmatpush1.bf16.msra.mxu0 0
    %407 = vmatprep.subr.bf16.mxu0 0
    %408 = vmatpush1.bf16.msra.mxu0 0
    %409 = vmatprep.subr.bf16.mxu0 0
    %410 = vmatpush1.bf16.msra.mxu0 0
    %411 = vmatprep.subr.bf16.mxu0 0
    %412 = vmatpush1.bf16.msra.mxu0 0
    %413 = vmatprep.subr.bf16.mxu0 0
    %414 = vmatpush1.bf16.msra.mxu0 0
    %415 = vmatprep.subr.bf16.mxu0 0
    %416 = vmatpush1.bf16.msra.mxu0 0
    %417 = vmatprep.subr.bf16.mxu0 0
    %418 = vmatpush1.bf16.msra.mxu0 0
    %419 = vmatprep.subr.bf16.mxu0 0
    %420 = vmatpush1.bf16.msra.mxu0 0
    %421 = vmatprep.mubr.bf16.mxu0 0
    %422 = vmatmul.mubr.bf16.gmra.mrb[0].mxu0 %v384
    %v423 = vpop.f32.mrb[0].mxu0
    %v424 = vadd.f32 0.0, %v423
    %v425 = vpop.f32.mrb[0].mxu0
    %v426 = vpop.f32.mrb[0].mxu0
    %v427 = vadd.f32 0.0, %v426
    %v428 = vpop.f32.mrb[0].mxu0
    %429 = vmatprep.mubr.bf16.mxu0 0
    %430 = vmatmul.mubr.bf16.gmra.mrb[0].mxu0 %v387
    %v431 = vpop.f32.mrb[0].mxu0
    %v432 = vadd.f32 0.0, %v431
    %v433 = vpop.f32.mrb[0].mxu0
    %v434 = vpop.f32.mrb[0].mxu0
    %v435 = vadd.f32 0.0, %v434
    %v436 = vpop.f32.mrb[0].mxu0
    %437 = vdwg.mxu0
    %v438 = vld [vmem:[#allocation14] sm:$0xf]
    %v439 = vld [vmem:[#allocation14 + $0x4] sm:$0xf]
    %v440 = vld [vmem:[#allocation14 + $0x8] sm:$0xf]
    %v441 = vld [vmem:[#allocation14 + $0xc] sm:$0xf]
    %v442 = vld [vmem:[#allocation14 + $0x10] sm:$0xf]
    %v443 = vld [vmem:[#allocation14 + $0x14] sm:$0xf]
    %v444 = vld [vmem:[#allocation14 + $0x18] sm:$0xf]
    %v445 = vld [vmem:[#allocation14 + $0x1c] sm:$0xf]
    %v446 = vld [vmem:[#allocation14 + $0x20] sm:$0xf]
    %v447 = vld [vmem:[#allocation14 + $0x24] sm:$0xf]
    %v448 = vld [vmem:[#allocation14 + $0x28] sm:$0xf]
    %v449 = vld [vmem:[#allocation14 + $0x2c] sm:$0xf]
    %v450 = vpack.c.bf16 %v287, %v284
    %v451 = vpack.c.bf16 %v295, %v292
    %v452 = vpack.c.bf16 %v358, %v355
    %v453 = vpack.c.bf16 %v366, %v363
    %v458 = vunpack.c.l.b16 %v442
    %v459 = vunpack.c.l.b16 %v443
    %v460 = vunpack.c.l.b16 %v444
    %v461 = vunpack.c.l.b16 %v445
    %v462 = vpack.c.b16 %v459, %v458
    %v463 = vpack.c.b16 %v461, %v460
    %v467 = vsel %vm182, %v452, 0
    %v470 = vsel %vm182, %v453, 0
    %472 = vmatprep.subr.bf16.mxu0 0
    %473 = vmatpush1.bf16.msra.mxu0 %v462
    %474 = vmatprep.subr.bf16.mxu0 0
    %475 = vmatpush1.bf16.msra.mxu0 %v463
    %476 = vmatprep.subr.bf16.mxu0 0
    %477 = vmatpush1.bf16.msra.mxu0 0
    %478 = vmatprep.subr.bf16.mxu0 0
    %479 = vmatpush1.bf16.msra.mxu0 0
    %480 = vmatprep.subr.bf16.mxu0 0
    %481 = vmatpush1.bf16.msra.mxu0 0
    %482 = vmatprep.subr.bf16.mxu0 0
    %483 = vmatpush1.bf16.msra.mxu0 0
    %484 = vmatprep.subr.bf16.mxu0 0
    %485 = vmatpush1.bf16.msra.mxu0 0
    %486 = vmatprep.subr.bf16.mxu0 0
    %487 = vmatpush1.bf16.msra.mxu0 0
    %488 = vmatprep.subr.bf16.mxu0 0
    %489 = vmatpush1.bf16.msra.mxu0 0
    %490 = vmatprep.subr.bf16.mxu0 0
    %491 = vmatpush1.bf16.msra.mxu0 0
    %492 = vmatprep.subr.bf16.mxu0 0
    %493 = vmatpush1.bf16.msra.mxu0 0
    %494 = vmatprep.subr.bf16.mxu0 0
    %495 = vmatpush1.bf16.msra.mxu0 0
    %496 = vmatprep.subr.bf16.mxu0 0
    %497 = vmatpush1.bf16.msra.mxu0 0
    %498 = vmatprep.subr.bf16.mxu0 0
    %499 = vmatpush1.bf16.msra.mxu0 0
    %500 = vmatprep.subr.bf16.mxu0 0
    %501 = vmatpush1.bf16.msra.mxu0 0
    %502 = vmatprep.subr.bf16.mxu0 0
    %503 = vmatpush1.bf16.msra.mxu0 0
    %504 = vmatprep.mubr.bf16.mxu0 0
    %505 = vmatmul.mubr.bf16.gmra.mrb[0].mxu0 %v467
    %v506 = vpop.f32.mrb[0].mxu0
    %v507 = vadd.f32 0.0, %v506
    %v508 = vpop.f32.mrb[0].mxu0
    %v509 = vpop.f32.mrb[0].mxu0
    %v510 = vadd.f32 0.0, %v509
    %v511 = vpop.f32.mrb[0].mxu0
    %512 = vmatprep.mubr.bf16.mxu0 0
    %513 = vmatmul.mubr.bf16.gmra.mrb[0].mxu0 %v470
    %v514 = vpop.f32.mrb[0].mxu0
    %v515 = vadd.f32 0.0, %v514
    %v516 = vpop.f32.mrb[0].mxu0
    %v517 = vpop.f32.mrb[0].mxu0
    %v518 = vadd.f32 0.0, %v517
    %v519 = vpop.f32.mrb[0].mxu0
    %520 = vdwg.mxu0
    %v525 = vunpack.c.l.b16 %v438
    %v526 = vunpack.c.l.b16 %v439
    %v527 = vunpack.c.l.b16 %v440
    %v528 = vunpack.c.l.b16 %v441
    %v529 = vpack.c.b16 %v526, %v525
    %v530 = vpack.c.b16 %v528, %v527
    %v534 = vsel %vm182, %v450, 0
    %v537 = vsel %vm182, %v451, 0
    %539 = vmatprep.subr.bf16.mxu0 0
    %540 = vmatpush1.bf16.msra.mxu0 %v529
    %541 = vmatprep.subr.bf16.mxu0 0
    %542 = vmatpush1.bf16.msra.mxu0 %v530
    %543 = vmatprep.subr.bf16.mxu0 0
    %544 = vmatpush1.bf16.msra.mxu0 0
    %545 = vmatprep.subr.bf16.mxu0 0
    %546 = vmatpush1.bf16.msra.mxu0 0
    %547 = vmatprep.subr.bf16.mxu0 0
    %548 = vmatpush1.bf16.msra.mxu0 0
    %549 = vmatprep.subr.bf16.mxu0 0
    %550 = vmatpush1.bf16.msra.mxu0 0
    %551 = vmatprep.subr.bf16.mxu0 0
    %552 = vmatpush1.bf16.msra.mxu0 0
    %553 = vmatprep.subr.bf16.mxu0 0
    %554 = vmatpush1.bf16.msra.mxu0 0
    %555 = vmatprep.subr.bf16.mxu0 0
    %556 = vmatpush1.bf16.msra.mxu0 0
    %557 = vmatprep.subr.bf16.mxu0 0
    %558 = vmatpush1.bf16.msra.mxu0 0
    %559 = vmatprep.subr.bf16.mxu0 0
    %560 = vmatpush1.bf16.msra.mxu0 0
    %561 = vmatprep.subr.bf16.mxu0 0
    %562 = vmatpush1.bf16.msra.mxu0 0
    %563 = vmatprep.subr.bf16.mxu0 0
    %564 = vmatpush1.bf16.msra.mxu0 0
    %565 = vmatprep.subr.bf16.mxu0 0
    %566 = vmatpush1.bf16.msra.mxu0 0
    %567 = vmatprep.subr.bf16.mxu0 0
    %568 = vmatpush1.bf16.msra.mxu0 0
    %569 = vmatprep.subr.bf16.mxu0 0
    %570 = vmatpush1.bf16.msra.mxu0 0
    %571 = vmatprep.mubr.bf16.mxu0 0
    %572 = vmatmul.mubr.bf16.gmra.mrb[0].mxu0 %v534
    %v573 = vpop.f32.mrb[0].mxu0
    %v574 = vadd.f32 %v507, %v573
    %v575 = vpop.f32.mrb[0].mxu0
    %v576 = vpop.f32.mrb[0].mxu0
    %v577 = vadd.f32 %v510, %v576
    %v578 = vpop.f32.mrb[0].mxu0
    %579 = vmatprep.mubr.bf16.mxu0 0
    %580 = vmatmul.mubr.bf16.gmra.mrb[0].mxu0 %v537
    %v581 = vpop.f32.mrb[0].mxu0
    %v582 = vadd.f32 %v515, %v581
    %v583 = vpop.f32.mrb[0].mxu0
    %v584 = vpop.f32.mrb[0].mxu0
    %v585 = vadd.f32 %v518, %v584
    %v586 = vpop.f32.mrb[0].mxu0
    %587 = vdwg.mxu0
    %v588 = vpack.c.bf16 %v427, %v424
    %v589 = vpack.c.bf16 %v435, %v432
    %v594 = vunpack.c.l.b16 %v446
    %v595 = vunpack.c.l.b16 %v447
    %v596 = vunpack.c.l.b16 %v448
    %v597 = vunpack.c.l.b16 %v449
    %v598 = vpack.c.b16 %v595, %v594
    %v599 = vpack.c.b16 %v597, %v596
    %v603 = vsel %vm182, %v588, 0
    %v606 = vsel %vm182, %v589, 0
    %608 = vmatprep.subr.bf16.mxu0 0
    %609 = vmatpush1.bf16.msra.mxu0 %v598
    %610 = vmatprep.subr.bf16.mxu0 0
    %611 = vmatpush1.bf16.msra.mxu0 %v599
    %612 = vmatprep.subr.bf16.mxu0 0
    %613 = vmatpush1.bf16.msra.mxu0 0
    %614 = vmatprep.subr.bf16.mxu0 0
    %615 = vmatpush1.bf16.msra.mxu0 0
    %616 = vmatprep.subr.bf16.mxu0 0
    %617 = vmatpush1.bf16.msra.mxu0 0
    %618 = vmatprep.subr.bf16.mxu0 0
    %619 = vmatpush1.bf16.msra.mxu0 0
    %620 = vmatprep.subr.bf16.mxu0 0
    %621 = vmatpush1.bf16.msra.mxu0 0
    %622 = vmatprep.subr.bf16.mxu0 0
    %623 = vmatpush1.bf16.msra.mxu0 0
    %624 = vmatprep.subr.bf16.mxu0 0
    %625 = vmatpush1.bf16.msra.mxu0 0
    %626 = vmatprep.subr.bf16.mxu0 0
    %627 = vmatpush1.bf16.msra.mxu0 0
    %628 = vmatprep.subr.bf16.mxu0 0
    %629 = vmatpush1.bf16.msra.mxu0 0
    %630 = vmatprep.subr.bf16.mxu0 0
    %631 = vmatpush1.bf16.msra.mxu0 0
    %632 = vmatprep.subr.bf16.mxu0 0
    %633 = vmatpush1.bf16.msra.mxu0 0
    %634 = vmatprep.subr.bf16.mxu0 0
    %635 = vmatpush1.bf16.msra.mxu0 0
    %636 = vmatprep.subr.bf16.mxu0 0
    %637 = vmatpush1.bf16.msra.mxu0 0
    %638 = vmatprep.subr.bf16.mxu0 0
    %639 = vmatpush1.bf16.msra.mxu0 0
    %640 = vmatprep.mubr.bf16.mxu0 0
    %641 = vmatmul.mubr.bf16.gmra.mrb[0].mxu0 %v603
    %v642 = vpop.f32.mrb[0].mxu0
    %v643 = vadd.f32 0.0, %v642
    %v644 = vpop.f32.mrb[0].mxu0
    %v645 = vpop.f32.mrb[0].mxu0
    %v646 = vadd.f32 0.0, %v645
    %v647 = vpop.f32.mrb[0].mxu0
    %648 = vmatprep.mubr.bf16.mxu0 0
    %649 = vmatmul.mubr.bf16.gmra.mrb[0].mxu0 %v606
    %v650 = vpop.f32.mrb[0].mxu0
    %v651 = vadd.f32 0.0, %v650
    %v652 = vpop.f32.mrb[0].mxu0
    %v653 = vpop.f32.mrb[0].mxu0
    %v654 = vadd.f32 0.0, %v653
    %v655 = vpop.f32.mrb[0].mxu0
    %656 = vdwg.mxu0
    %v657 = vadd.f32 %v574, %v643
    %v658 = vadd.f32 %v577, %v646
    %v659 = vadd.f32 %v582, %v651
    %v660 = vadd.f32 %v585, %v654
    %v661 = vld [vmem:[#allocation16] sm:$0x1]
    %v662 = vlaneseq
    %v663 = vshrl.u32 %v662, 7
    %v664 = vsub.s32 0, %v663
    %v665 = vrot.slane %v661, %v664
    %v666 = vadd.f32 %v657, %v665
    %v667 = vadd.f32 %v658, %v665
    %v668 = vadd.f32 %v659, %v665
    %v669 = vadd.f32 %v660, %v665
    %v670 = vld [vmem:[#allocation16 + $0x1] sm:$0x1]
    %v671 = vlaneseq
    %v672 = vshrl.u32 %v671, 7
    %v673 = vsub.s32 0, %v672
    %v674 = vrot.slane %v670, %v673
    %v675 = vmul.f32 %v284, %v674
    %v676 = vmul.f32 %v287, %v674
    %v677 = vmul.f32 %v292, %v674
    %v678 = vmul.f32 %v295, %v674
    %v679 = vld [vmem:[#allocation16 + $0x2] sm:$0x1]
    %v680 = vlaneseq
    %v681 = vshrl.u32 %v680, 7
    %v682 = vsub.s32 0, %v681
    %v683 = vrot.slane %v679, %v682
    %v684 = vmul.f32 %v355, %v683
    %v685 = vmul.f32 %v358, %v683
    %v686 = vmul.f32 %v363, %v683
    %v687 = vmul.f32 %v366, %v683
    %v688 = vadd.f32 %v675, %v684
    %v689 = vadd.f32 %v676, %v685
    %v690 = vadd.f32 %v677, %v686
    %v691 = vadd.f32 %v678, %v687
    %v692 = vld [vmem:[#allocation16 + $0x3] sm:$0x1]
    %v693 = vlaneseq
    %v694 = vshrl.u32 %v693, 7
    %v695 = vsub.s32 0, %v694
    %v696 = vrot.slane %v692, %v695
    %v697 = vmul.f32 %v424, %v696
    %v698 = vmul.f32 %v427, %v696
    %v699 = vmul.f32 %v432, %v696
    %v700 = vmul.f32 %v435, %v696
    %v701 = vadd.f32 %v688, %v697
    %v702 = vadd.f32 %v689, %v698
    %v703 = vadd.f32 %v690, %v699
    %v704 = vadd.f32 %v691, %v700
    %v705 = vlaneseq
    %v706 = vshrl.u32 %v705, 7
    %v707 = vadd.s32 %v706, 8
    %v708 = vadd.s32 %v706, 16
    %v709 = vadd.s32 %v706, 24
    %v710 = vlaneseq
    %v711 = vand.u32 %v710, 127
    %v712 = vmul.u32 %v711, 8
    %vm713 = vcmp.ge.s32.totalorder %v706, %v712
    %vm714 = vcmp.ge.s32.totalorder %v707, %v712
    %vm715 = vcmp.ge.s32.totalorder %v708, %v712
    %vm716 = vcmp.ge.s32.totalorder %v709, %v712
    %v717 = vadd.s32 %v711, 1
    %v718 = vmul.u32 %v717, 8
    %vm719 = vcmp.lt.s32.totalorder %v706, %v718
    %vm720 = vcmp.lt.s32.totalorder %v707, %v718
    %vm721 = vcmp.lt.s32.totalorder %v708, %v718
    %vm722 = vcmp.lt.s32.totalorder %v709, %v718
    %vm723 = vmand %vm713, %vm719
    %vm724 = vmand %vm714, %vm720
    %vm725 = vmand %vm715, %vm721
    %vm726 = vmand %vm716, %vm722
    %v727 = vsel %vm723, 1, 0
    %v728 = vsel %vm724, 1, 0
    %v729 = vsel %vm725, 1, 0
    %v730 = vsel %vm726, 1, 0
    %v731 = vcvt.s32.f32 %v727
    %v732 = vcvt.s32.f32 %v728
    %v733 = vcvt.s32.f32 %v729
    %v734 = vcvt.s32.f32 %v730
    %v736 = vsel %vm182, %v701, 0
    %v739 = vsel %vm182, %v702, 0
    %v742 = vsel %vm182, %v703, 0
    %v745 = vsel %vm182, %v704, 0
    %747 = vmatprep.subr.mxu0 0.0
    %748 = vmatpush1.msra.mxu0 %v731
    %749 = vmatprep.subr.mxu0 0.0
    %750 = vmatpush1.msra.mxu0 %v732
    %751 = vmatprep.subr.mxu0 0.0
    %752 = vmatpush1.msra.mxu0 %v733
    %753 = vmatprep.subr.mxu0 0.0
    %754 = vmatpush1.msra.mxu0 %v734
    %755 = vmatprep.subr.mxu0 0.0
    %756 = vmatpush1.msra.mxu0 0.0
    %757 = vmatprep.subr.mxu0 0.0
    %758 = vmatpush1.msra.mxu0 0.0
    %759 = vmatprep.subr.mxu0 0.0
    %760 = vmatpush1.msra.mxu0 0.0
    %761 = vmatprep.subr.mxu0 0.0
    %762 = vmatpush1.msra.mxu0 0.0
    %763 = vmatprep.subr.mxu0 0.0
    %764 = vmatpush1.msra.mxu0 0.0
    %765 = vmatprep.subr.mxu0 0.0
    %766 = vmatpush1.msra.mxu0 0.0
    %767 = vmatprep.subr.mxu0 0.0
    %768 = vmatpush1.msra.mxu0 0.0
    %769 = vmatprep.subr.mxu0 0.0
    %770 = vmatpush1.msra.mxu0 0.0
    %771 = vmatprep.subr.mxu0 0.0
    %772 = vmatpush1.msra.mxu0 0.0
    %773 = vmatprep.subr.mxu0 0.0
    %774 = vmatpush1.msra.mxu0 0.0
    %775 = vmatprep.subr.mxu0 0.0
    %776 = vmatpush1.msra.mxu0 0.0
    %777 = vmatprep.subr.mxu0 0.0
    %778 = vmatpush1.msra.mxu0 0.0
    %779 = vmatprep.subr.mxu0 0.0
    %780 = vmatpush1.msra.mxu0 0.0
    %781 = vmatprep.subr.mxu0 0.0
    %782 = vmatpush1.msra.mxu0 0.0
    %783 = vmatprep.subr.mxu0 0.0
    %784 = vmatpush1.msra.mxu0 0.0
    %785 = vmatprep.subr.mxu0 0.0
    %786 = vmatpush1.msra.mxu0 0.0
    %787 = vmatprep.subr.mxu0 0.0
    %788 = vmatpush1.msra.mxu0 0.0
    %789 = vmatprep.subr.mxu0 0.0
    %790 = vmatpush1.msra.mxu0 0.0
    %791 = vmatprep.subr.mxu0 0.0
    %792 = vmatpush1.msra.mxu0 0.0
    %793 = vmatprep.subr.mxu0 0.0
    %794 = vmatpush1.msra.mxu0 0.0
    %795 = vmatprep.subr.mxu0 0.0
    %796 = vmatpush1.msra.mxu0 0.0
    %797 = vmatprep.subr.mxu0 0.0
    %798 = vmatpush1.msra.mxu0 0.0
    %799 = vmatprep.subr.mxu0 0.0
    %800 = vmatpush1.msra.mxu0 0.0
    %801 = vmatprep.subr.mxu0 0.0
    %802 = vmatpush1.msra.mxu0 0.0
    %803 = vmatprep.subr.mxu0 0.0
    %804 = vmatpush1.msra.mxu0 0.0
    %805 = vmatprep.subr.mxu0 0.0
    %806 = vmatpush1.msra.mxu0 0.0
    %807 = vmatprep.subr.mxu0 0.0
    %808 = vmatpush1.msra.mxu0 0.0
    %809 = vmatprep.subr.mxu0 0.0
    %810 = vmatpush1.msra.mxu0 0.0
    %811 = vmatprep.mubr.f32.mxu0 0.0
    %812 = vmatmul.mubr.f32.gmra.mrb[0].mxu0 %v736
    %v813 = vpop.f32.mrb[0].mxu0
    %v814 = vadd.f32 0.0, %v813
    %v815 = vpop.f32.mrb[0].mxu0
    %816 = vmatprep.mubr.f32.mxu0 0.0
    %817 = vmatmul.mubr.f32.gmra.mrb[0].mxu0 %v739
    %v818 = vpop.f32.mrb[0].mxu0
    %v819 = vadd.f32 0.0, %v818
    %v820 = vpop.f32.mrb[0].mxu0
    %821 = vmatprep.mubr.f32.mxu0 0.0
    %822 = vmatmul.mubr.f32.gmra.mrb[0].mxu0 %v742
    %v823 = vpop.f32.mrb[0].mxu0
    %v824 = vadd.f32 0.0, %v823
    %v825 = vpop.f32.mrb[0].mxu0
    %826 = vmatprep.mubr.f32.mxu0 0.0
    %827 = vmatmul.mubr.f32.gmra.mrb[0].mxu0 %v745
    %v828 = vpop.f32.mrb[0].mxu0
    %v829 = vadd.f32 0.0, %v828
    %v830 = vpop.f32.mrb[0].mxu0
    %831 = vdwg.mxu0
    %vm832 = vcmp.gt.f32.partialorder %v814, 0.0
    %vm833 = vcmp.gt.f32.partialorder %v819, 0.0
    %vm834 = vcmp.gt.f32.partialorder %v824, 0.0
    %vm835 = vcmp.gt.f32.partialorder %v829, 0.0
    %v836 = vmul.f32 %v814, 0.01
    %v837 = vmul.f32 %v819, 0.01
    %v838 = vmul.f32 %v824, 0.01
    %v839 = vmul.f32 %v829, 0.01
    %v840 = vsel %vm832, %v814, %v836
    %v841 = vsel %vm833, %v819, %v837
    %v842 = vsel %vm834, %v824, %v838
    %v843 = vsel %vm835, %v829, %v839
    %vm844 = vcmask 31744
    %v845 = vsel %vm844, %v840, -inf
    %846 = vmax.xlane.f32.xlu0 %v845
    %v847 = vpop.xlane.xlu0 %846
    %v848 = vsel %vm844, %v841, -inf
    %849 = vmax.xlane.f32.xlu0 %v848
    %v850 = vpop.xlane.xlu0 %849
    %v851 = vsel %vm844, %v842, -inf
    %852 = vmax.xlane.f32.xlu0 %v851
    %v853 = vpop.xlane.xlu0 %852
    %v854 = vsel %vm844, %v843, -inf
    %855 = vmax.xlane.f32.xlu0 %v854
    %v856 = vpop.xlane.xlu0 %855
    %v857 = vmax.f32 %v847, %v850
    %v858 = vmax.f32 %v853, %v856
    %v859 = vmax.f32 %v857, %v858
    %v860 = vrot.slane %v859, 4
    %v861 = vmax.f32 %v859, %v860
    %v862 = vrot.slane %v861, 2
    %v863 = vmax.f32 %v861, %v862
    %v864 = vrot.slane %v863, 1
    %v865 = vmax.f32 %v863, %v864
    %v866 = vsub.f32 %v840, %v865
    %v867 = vsub.f32 %v841, %v865
    %v868 = vsub.f32 %v842, %v865
    %v869 = vsub.f32 %v843, %v865
    %v870 = vmul.f32 %v866, 1.442695
    %v871 = vpow.pop %v870
    %v872 = vmul.f32 %v867, 1.442695
    %v873 = vpow.pop %v872
    %v874 = vmul.f32 %v868, 1.442695
    %v875 = vpow.pop %v874
    %v876 = vmul.f32 %v869, 1.442695
    %v877 = vpow.pop %v876
    %v878 = vmul.u32 %v706, 8
    %vm879 = vcmp.ge.s32.totalorder %v711, %v878
    %v880 = vadd.s32 %v706, 1
    %v881 = vmul.u32 %v880, 8
    %vm882 = vcmp.lt.s32.totalorder %v711, %v881
    %vm883 = vmand %vm879, %vm882
    %v884 = vsel %vm883, 1, 0
    %v885 = vcvt.s32.f32 %v884
    %v887 = vsel %vm844, %v871, 0
    %v890 = vsel %vm844, %v873, 0
    %v893 = vsel %vm844, %v875, 0
    %v896 = vsel %vm844, %v877, 0
    %vm898 = vcmask 1043456
    %v900 = vsel %vm898, %v885, 0
    %902 = vmatprep.subr.mxu0 0.0
    %903 = vmatpush1.msra.mxu0 %v900
    %904 = vmatprep.subr.mxu0 0.0
    %905 = vmatpush1.msra.mxu0 0.0
    %906 = vmatprep.subr.mxu0 0.0
    %907 = vmatpush1.msra.mxu0 0.0
    %908 = vmatprep.subr.mxu0 0.0
    %909 = vmatpush1.msra.mxu0 0.0
    %910 = vmatprep.subr.mxu0 0.0
    %911 = vmatpush1.msra.mxu0 0.0
    %912 = vmatprep.subr.mxu0 0.0
    %913 = vmatpush1.msra.mxu0 0.0
    %914 = vmatprep.subr.mxu0 0.0
    %915 = vmatpush1.msra.mxu0 0.0
    %916 = vmatprep.subr.mxu0 0.0
    %917 = vmatpush1.msra.mxu0 0.0
    %918 = vmatprep.subr.mxu0 0.0
    %919 = vmatpush1.msra.mxu0 0.0
    %920 = vmatprep.subr.mxu0 0.0
    %921 = vmatpush1.msra.mxu0 0.0
    %922 = vmatprep.subr.mxu0 0.0
    %923 = vmatpush1.msra.mxu0 0.0
    %924 = vmatprep.subr.mxu0 0.0
    %925 = vmatpush1.msra.mxu0 0.0
    %926 = vmatprep.subr.mxu0 0.0
    %927 = vmatpush1.msra.mxu0 0.0
    %928 = vmatprep.subr.mxu0 0.0
    %929 = vmatpush1.msra.mxu0 0.0
    %930 = vmatprep.subr.mxu0 0.0
    %931 = vmatpush1.msra.mxu0 0.0
    %932 = vmatprep.subr.mxu0 0.0
    %933 = vmatpush1.msra.mxu0 0.0
    %934 = vmatprep.subr.mxu0 0.0
    %935 = vmatpush1.msra.mxu0 0.0
    %936 = vmatprep.subr.mxu0 0.0
    %937 = vmatpush1.msra.mxu0 0.0
    %938 = vmatprep.subr.mxu0 0.0
    %939 = vmatpush1.msra.mxu0 0.0
    %940 = vmatprep.subr.mxu0 0.0
    %941 = vmatpush1.msra.mxu0 0.0
    %942 = vmatprep.subr.mxu0 0.0
    %943 = vmatpush1.msra.mxu0 0.0
    %944 = vmatprep.subr.mxu0 0.0
    %945 = vmatpush1.msra.mxu0 0.0
    %946 = vmatprep.subr.mxu0 0.0
    %947 = vmatpush1.msra.mxu0 0.0
    %948 = vmatprep.subr.mxu0 0.0
    %949 = vmatpush1.msra.mxu0 0.0
    %950 = vmatprep.subr.mxu0 0.0
    %951 = vmatpush1.msra.mxu0 0.0
    %952 = vmatprep.subr.mxu0 0.0
    %953 = vmatpush1.msra.mxu0 0.0
    %954 = vmatprep.subr.mxu0 0.0
    %955 = vmatpush1.msra.mxu0 0.0
    %956 = vmatprep.subr.mxu0 0.0
    %957 = vmatpush1.msra.mxu0 0.0
    %958 = vmatprep.subr.mxu0 0.0
    %959 = vmatpush1.msra.mxu0 0.0
    %960 = vmatprep.subr.mxu0 0.0
    %961 = vmatpush1.msra.mxu0 0.0
    %962 = vmatprep.subr.mxu0 0.0
    %963 = vmatpush1.msra.mxu0 0.0
    %964 = vmatprep.subr.mxu0 0.0
    %965 = vmatpush1.msra.mxu0 0.0
    %966 = vmatprep.mubr.f32.mxu0 0.0
    %967 = vmatmul.mubr.f32.gmra.mrb[0].mxu0 %v887
    %v968 = vpop.f32.mrb[0].mxu0
    %v969 = vadd.f32 0.0, %v968
    %v970 = vpop.f32.mrb[0].mxu0
    %971 = vmatprep.mubr.f32.mxu0 0.0
    %972 = vmatmul.mubr.f32.gmra.mrb[0].mxu0 %v890
    %v973 = vpop.f32.mrb[0].mxu0
    %v974 = vadd.f32 0.0, %v973
    %v975 = vpop.f32.mrb[0].mxu0
    %976 = vmatprep.mubr.f32.mxu0 0.0
    %977 = vmatmul.mubr.f32.gmra.mrb[0].mxu0 %v893
    %v978 = vpop.f32.mrb[0].mxu0
    %v979 = vadd.f32 0.0, %v978
    %v980 = vpop.f32.mrb[0].mxu0
    %981 = vmatprep.mubr.f32.mxu0 0.0
    %982 = vmatmul.mubr.f32.gmra.mrb[0].mxu0 %v896
    %v983 = vpop.f32.mrb[0].mxu0
    %v984 = vadd.f32 0.0, %v983
    %v985 = vpop.f32.mrb[0].mxu0
    %986 = vdwg.mxu0
    %v987 = vld [vmem:[#allocation10] sm:$0xf]
    %v988 = vld [vmem:[#allocation10 + $0x4] sm:$0xf]
    %v989 = vmul.f32 %v969, %v355
    %v990 = vmul.f32 %v974, %v358
    %v991 = vmul.f32 %v979, %v363
    %v992 = vmul.f32 %v984, %v366
    %v993 = vpack.c.bf16 %v990, %v989
    %v994 = vpack.c.bf16 %v992, %v991
    %v997 = vunpack.c.l.b16 %v987
    %v998 = vunpack.c.l.b16 %v988
    %v999 = vpack.c.b16 %v998, %v997
    %v1001 = vsel %vm182, %v999, 0
    %1003 = vmatprep.subr.bf16.mxu0 0
    %1004 = vmatpush1.bf16.msra.mxu0 %v993
    %1005 = vmatprep.subr.bf16.mxu0 0
    %1006 = vmatpush1.bf16.msra.mxu0 %v994
    %1007 = vmatprep.subr.bf16.mxu0 0
    %1008 = vmatpush1.bf16.msra.mxu0 0
    %1009 = vmatprep.subr.bf16.mxu0 0
    %1010 = vmatpush1.bf16.msra.mxu0 0
    %1011 = vmatprep.subr.bf16.mxu0 0
    %1012 = vmatpush1.bf16.msra.mxu0 0
    %1013 = vmatprep.subr.bf16.mxu0 0
    %1014 = vmatpush1.bf16.msra.mxu0 0
    %1015 = vmatprep.subr.bf16.mxu0 0
    %1016 = vmatpush1.bf16.msra.mxu0 0
    %1017 = vmatprep.subr.bf16.mxu0 0
    %1018 = vmatpush1.bf16.msra.mxu0 0
    %1019 = vmatprep.subr.bf16.mxu0 0
    %1020 = vmatpush1.bf16.msra.mxu0 0
    %1021 = vmatprep.subr.bf16.mxu0 0
    %1022 = vmatpush1.bf16.msra.mxu0 0
    %1023 = vmatprep.subr.bf16.mxu0 0
    %1024 = vmatpush1.bf16.msra.mxu0 0
    %1025 = vmatprep.subr.bf16.mxu0 0
    %1026 = vmatpush1.bf16.msra.mxu0 0
    %1027 = vmatprep.subr.bf16.mxu0 0
    %1028 = vmatpush1.bf16.msra.mxu0 0
    %1029 = vmatprep.subr.bf16.mxu0 0
    %1030 = vmatpush1.bf16.msra.mxu0 0
    %1031 = vmatprep.subr.bf16.mxu0 0
    %1032 = vmatpush1.bf16.msra.mxu0 0
    %1033 = vmatprep.subr.bf16.mxu0 0
    %1034 = vmatpush1.bf16.msra.mxu0 0
    %1035 = vmatprep.mubr.bf16.mxu0 0
    %1036 = vmatmul.mubr.bf16.gmra.mrb[0].mxu0 %v1001
    %v1037 = vpop.f32.mrb[0].mxu0
    %v1038 = vadd.f32 0.0, %v1037
    %v1039 = vpop.f32.mrb[0].mxu0
    %v1040 = vpop.f32.mrb[0].mxu0
    %v1041 = vadd.f32 0.0, %v1040
    %v1042 = vpop.f32.mrb[0].mxu0
    %1043 = vdwg.mxu0
    %v1044 = vpack.c.bf16 %v974, %v969
    %v1045 = vpack.c.bf16 %v984, %v979
    %1046 = vmatprep.subr.bf16.mxu0 0
    %1047 = vmatpush1.bf16.msra.mxu0 %v1044
    %1048 = vmatprep.subr.bf16.mxu0 0
    %1049 = vmatpush1.bf16.msra.mxu0 %v1045
    %1050 = vmatprep.subr.bf16.mxu0 0
    %1051 = vmatpush1.bf16.msra.mxu0 0
    %1052 = vmatprep.subr.bf16.mxu0 0
    %1053 = vmatpush1.bf16.msra.mxu0 0
    %1054 = vmatprep.subr.bf16.mxu0 0
    %1055 = vmatpush1.bf16.msra.mxu0 0
    %1056 = vmatprep.subr.bf16.mxu0 0
    %1057 = vmatpush1.bf16.msra.mxu0 0
    %1058 = vmatprep.subr.bf16.mxu0 0
    %1059 = vmatpush1.bf16.msra.mxu0 0
    %1060 = vmatprep.subr.bf16.mxu0 0
    %1061 = vmatpush1.bf16.msra.mxu0 0
    %1062 = vmatprep.subr.bf16.mxu0 0
    %1063 = vmatpush1.bf16.msra.mxu0 0
    %1064 = vmatprep.subr.bf16.mxu0 0
    %1065 = vmatpush1.bf16.msra.mxu0 0
    %1066 = vmatprep.subr.bf16.mxu0 0
    %1067 = vmatpush1.bf16.msra.mxu0 0
    %1068 = vmatprep.subr.bf16.mxu0 0
    %1069 = vmatpush1.bf16.msra.mxu0 0
    %1070 = vmatprep.subr.bf16.mxu0 0
    %1071 = vmatpush1.bf16.msra.mxu0 0
    %1072 = vmatprep.subr.bf16.mxu0 0
    %1073 = vmatpush1.bf16.msra.mxu0 0
    %1074 = vmatprep.subr.bf16.mxu0 0
    %1075 = vmatpush1.bf16.msra.mxu0 0
    %1076 = vmatprep.subr.bf16.mxu0 0
    %1077 = vmatpush1.bf16.msra.mxu0 0
    %1078 = vmatprep.mubr.bf16.mxu0 0
    %1079 = vmatmul.mubr.bf16.gmra.mrb[0].mxu0 %v1001
    %v1080 = vpop.f32.mrb[0].mxu0
    %v1081 = vadd.f32 0.0, %v1080
    %v1082 = vpop.f32.mrb[0].mxu0
    %v1083 = vpop.f32.mrb[0].mxu0
    %v1084 = vadd.f32 0.0, %v1083
    %v1085 = vpop.f32.mrb[0].mxu0
    %1086 = vdwg.mxu0
    %v1087 = vmax.f32 %v1081, 1e-20
    %v1088 = vmax.f32 %v1084, 1e-20
    %v1089 = vrcp.pop %v1087
    %v1090 = vrcp.pop %v1088
    %v1091 = vmul.f32 %v1038, %v1089
    %v1092 = vmul.f32 %v1041, %v1090
    %v1093 = vld [vmem:[#allocation16 + $0x4] sm:$0x1]
    %v1094 = vld [vmem:[#allocation16 + $0x5] sm:$0x1]
    %v1095 = vsel %vm182, %v1091, 0.0
    %v1096 = vsel %vm182, %v1092, 0.0
    %v1097 = vadd.f32 %v1095, %v1096
    %v1098 = vrot.slane %v1097, 4
    %v1099 = vadd.f32 %v1097, %v1098
    %v1100 = vrot.slane %v1099, 2
    %v1101 = vadd.f32 %v1099, %v1100
    %v1102 = vrot.slane %v1101, 1
    %v1103 = vadd.f32 %v1101, %v1102
    %v1104 = vmul.f32 %v1103, 0.0625
    %v1105 = vsub.f32 %v1091, %v1104
    %v1106 = vsub.f32 %v1092, %v1104
    %v1107 = vmul.f32 %v1105, %v1105
    %v1108 = vmul.f32 %v1106, %v1106
    %v1109 = vsel %vm182, %v1107, 0.0
    %v1110 = vsel %vm182, %v1108, 0.0
    %v1111 = vadd.f32 %v1109, %v1110
    %v1112 = vrot.slane %v1111, 4
    %v1113 = vadd.f32 %v1111, %v1112
    %v1114 = vrot.slane %v1113, 2
    %v1115 = vadd.f32 %v1113, %v1114
    %v1116 = vrot.slane %v1115, 1
    %v1117 = vadd.f32 %v1115, %v1116
    %v1118 = vmul.f32 %v1117, 0.0625
    %v1119 = vadd.f32 %v1118, 1e-05
    %v1120 = vrsqrt.pop %v1119
    %v1121 = vmul.f32 %v1105, %v1120
    %v1122 = vmul.f32 %v1106, %v1120
    %v1123 = vlaneseq
    %v1124 = vshrl.u32 %v1123, 7
    %v1125 = vsub.s32 0, %v1124
    %v1126 = vrot.slane %v1093, %v1125
    %v1127 = vmul.f32 %v1121, %v1126
    %v1128 = vmul.f32 %v1122, %v1126
    %v1129 = vlaneseq
    %v1130 = vshrl.u32 %v1129, 7
    %v1131 = vsub.s32 0, %v1130
    %v1132 = vrot.slane %v1094, %v1131
    %v1133 = vadd.f32 %v1127, %v1132
    %v1134 = vadd.f32 %v1128, %v1132
    %vm1135 = vcmp.gt.f32.partialorder %v1133, 0.0
    %vm1136 = vcmp.gt.f32.partialorder %v1134, 0.0
    %v1137 = vmin.f32 %v1133, 0.0
    %v1138 = vmin.f32 %v1134, 0.0
    %v1139 = vmul.f32 %v1137, 1.442695
    %v1140 = vpow.pop %v1139
    %v1141 = vmul.f32 %v1138, 1.442695
    %v1142 = vpow.pop %v1141
    %v1143 = vsub.f32 %v1140, 1.0
    %v1144 = vsub.f32 %v1142, 1.0
    %v1145 = vsel %vm1135, %v1133, %v1143
    %v1146 = vsel %vm1136, %v1134, %v1144
    %v1147 = vld [vmem:[#allocation16 + $0x6] sm:$0x1]
    %v1148 = vld [vmem:[#allocation16 + $0x7] sm:$0x1]
    %v1149 = vsel %vm182, %v666, 0.0
    %v1150 = vsel %vm182, %v667, 0.0
    %v1151 = vadd.f32 %v1149, %v1150
    %v1152 = vsel %vm182, %v668, 0.0
    %v1153 = vadd.f32 %v1151, %v1152
    %v1154 = vsel %vm182, %v669, 0.0
    %v1155 = vadd.f32 %v1153, %v1154
    %v1156 = vrot.slane %v1155, 4
    %v1157 = vadd.f32 %v1155, %v1156
    %v1158 = vrot.slane %v1157, 2
    %v1159 = vadd.f32 %v1157, %v1158
    %v1160 = vrot.slane %v1159, 1
    %v1161 = vadd.f32 %v1159, %v1160
    %v1162 = vmul.f32 %v1161, 0.03125
    %v1163 = vsub.f32 %v666, %v1162
    %v1164 = vsub.f32 %v667, %v1162
    %v1165 = vsub.f32 %v668, %v1162
    %v1166 = vsub.f32 %v669, %v1162
    %v1167 = vmul.f32 %v1163, %v1163
    %v1168 = vmul.f32 %v1164, %v1164
    %v1169 = vmul.f32 %v1165, %v1165
    %v1170 = vmul.f32 %v1166, %v1166
    %v1171 = vsel %vm182, %v1167, 0.0
    %v1172 = vsel %vm182, %v1168, 0.0
    %v1173 = vadd.f32 %v1171, %v1172
    %v1174 = vsel %vm182, %v1169, 0.0
    %v1175 = vadd.f32 %v1173, %v1174
    %v1176 = vsel %vm182, %v1170, 0.0
    %v1177 = vadd.f32 %v1175, %v1176
    %v1178 = vrot.slane %v1177, 4
    %v1179 = vadd.f32 %v1177, %v1178
    %v1180 = vrot.slane %v1179, 2
    %v1181 = vadd.f32 %v1179, %v1180
    %v1182 = vrot.slane %v1181, 1
    %v1183 = vadd.f32 %v1181, %v1182
    %v1184 = vmul.f32 %v1183, 0.03125
    %v1185 = vadd.f32 %v1184, 1e-05
    %v1186 = vrsqrt.pop %v1185
    %v1187 = vmul.f32 %v1163, %v1186
    %v1188 = vmul.f32 %v1164, %v1186
    %v1189 = vmul.f32 %v1165, %v1186
    %v1190 = vmul.f32 %v1166, %v1186
    %v1191 = vlaneseq
    %v1192 = vshrl.u32 %v1191, 7
    %v1193 = vsub.s32 0, %v1192
    %v1194 = vrot.slane %v1147, %v1193
    %v1195 = vmul.f32 %v1187, %v1194
    %v1196 = vmul.f32 %v1188, %v1194
    %v1197 = vmul.f32 %v1189, %v1194
    %v1198 = vmul.f32 %v1190, %v1194
    %v1199 = vlaneseq
    %v1200 = vshrl.u32 %v1199, 7
    %v1201 = vsub.s32 0, %v1200
    %v1202 = vrot.slane %v1148, %v1201
    %v1203 = vadd.f32 %v1195, %v1202
    %v1204 = vadd.f32 %v1196, %v1202
    %v1205 = vadd.f32 %v1197, %v1202
    %v1206 = vadd.f32 %v1198, %v1202
    %vm1207 = vcmp.gt.f32.partialorder %v1203, 0.0
    %vm1208 = vcmp.gt.f32.partialorder %v1204, 0.0
    %vm1209 = vcmp.gt.f32.partialorder %v1205, 0.0
    %vm1210 = vcmp.gt.f32.partialorder %v1206, 0.0
    %v1211 = vmin.f32 %v1203, 0.0
    %v1212 = vmin.f32 %v1204, 0.0
    %v1213 = vmin.f32 %v1205, 0.0
    %v1214 = vmin.f32 %v1206, 0.0
    %v1215 = vmul.f32 %v1211, 1.442695
    %v1216 = vpow.pop %v1215
    %v1217 = vmul.f32 %v1212, 1.442695
    %v1218 = vpow.pop %v1217
    %v1219 = vmul.f32 %v1213, 1.442695
    %v1220 = vpow.pop %v1219
    %v1221 = vmul.f32 %v1214, 1.442695
    %v1222 = vpow.pop %v1221
    %v1223 = vsub.f32 %v1216, 1.0
    %v1224 = vsub.f32 %v1218, 1.0
    %v1225 = vsub.f32 %v1220, 1.0
    %v1226 = vsub.f32 %v1222, 1.0
    %v1227 = vsel %vm1207, %v1203, %v1223
    %v1228 = vsel %vm1208, %v1204, %v1224
    %v1229 = vsel %vm1209, %v1205, %v1225
    %v1230 = vsel %vm1210, %v1206, %v1226
    %v1231 = vadd.f32 %v1145, %v157
    %v1232 = vadd.f32 %v1146, %v158
    %v1233 = vadd.f32 %v1227, %v159
    %v1234 = vadd.f32 %v1228, %v160
    %v1235 = vadd.f32 %v1229, %v161
    %v1236 = vadd.f32 %v1230, %v162
    %1237 = vst.msk [vmem:[#allocation17] sm:$0xff] %vm182, %v1231
    %1238 = vst.msk [vmem:[#allocation17 + $0x8] sm:$0xff] %vm182, %v1232
    %1239 = vst.msk [vmem:[#allocation18] sm:$0xff] %vm182, %v1233
    %1240 = vst.msk [vmem:[#allocation18 + $0x8] sm:$0xff] %vm182, %v1234
    %1241 = vst.msk [vmem:[#allocation18 + $0x10] sm:$0xff] %vm182, %v1235
    %1242 = vst.msk [vmem:[#allocation18 + $0x18] sm:$0xff] %vm182, %v1236
    // Predicated region
    $region74: #{tpu_custom_call.1} parent=1 // pred_check
      _
    $region75: #{tpu_custom_call.1} parent=1 // pred_check_branch
      %1244 = sbr.rel (0) target = $region77
    $region76: #{tpu_custom_call.1} parent=1 // pred_region
      %s1246 = ssub.s32 256, 256
      %1247 = vsyncadd [#allocation4], %s1246
      %s1248 = sshll.u32 [#allocation17], 4
      %s1249 = int_to_ptr.vmem [resolvable:$true] %s1248
      %1254 = dma.vmem_to_hbm [thread:$0]  %s1249, 256, %s9, [#allocation4], 128, 128, 8
    $region77: #{tpu_custom_call.1} parent=1 // pred_fallthru
      _
    // Predicated region
    $region78: #{tpu_custom_call.1} parent=1 // pred_check
      _
    $region79: #{tpu_custom_call.1} parent=1 // pred_check_branch
      %1256 = sbr.rel (0) target = $region81
    $region80: #{tpu_custom_call.1} parent=1 // pred_region
      %s1258 = ssub.s32 512, 512
      %1259 = vsyncadd [#allocation19], %s1258
      %s1260 = sshll.u32 [#allocation18], 4
      %s1261 = int_to_ptr.vmem [resolvable:$true] %s1260
      %1266 = dma.vmem_to_hbm [thread:$0]  %s1261, 512, %s10, [#allocation19], 128, 128, 8
    $region81: #{tpu_custom_call.1} parent=1 // pred_fallthru
      _
    // Predicated region
    $region82: #{tpu_custom_call.1} parent=1 // pred_check
      _
    $region83: #{tpu_custom_call.1} parent=1 // pred_check_branch
      %1268 = sbr.rel (0) target = $region85
    $region84: #{tpu_custom_call.1} parent=1 // pred_region
      %1269 = dma.done [#allocation4], 256
    $region85: #{tpu_custom_call.1} parent=1 // pred_fallthru
      _
    // Predicated region
    $region86: #{tpu_custom_call.1} parent=1 // pred_check
      _
    $region87: #{tpu_custom_call.1} parent=1 // pred_check_branch
      %1271 = sbr.rel (0) target = $region89
    $region88: #{tpu_custom_call.1} parent=1 // pred_region
      %1272 = dma.done [#allocation19], 512
    $region89: #{tpu_custom_call.1} parent=1 // pred_fallthru
      _
    %1273 = vsyncpa [#allocation3], 1
    %1274 = vsyncpa [#allocation6], 1
    %1275 = vsyncpa [#allocation9], 1
    %1276 = vsyncpa [#allocation12], 1
    %1277 = vsyncpa [#allocation15], 1
    %1278 = vsyncpa [#allocation4], 1
    %1279 = vsyncpa [#allocation19], 1

</llo_original>
